<compile_context>
chip_gen: v5e
topology: v5e:2x2
jax: 0.10.0
libtpu: 0.0.40
codegen_flags: <defaults>
</compile_context>

<pallas_src>
import functools

import jax
import jax.numpy as jnp
from jax.experimental import pallas as pl
from jax.experimental.pallas import tpu as pltpu


# ----------------------------------------------------------- fused kernel --
def _fused_conv_loss_iou_kernel(
    x_ref,      # (Cin, Ls)   bf16 : row-tile slab (channels on sublanes, pixels on lanes)
    w_ref,      # (9, C, Cin) bf16 : conv weights, tap-major (kh*3+kw)
    b_ref,      # (C, 1)      f32  : conv bias
    lbl_ref,    # (1, tile)   i32  : labels for this tile (sentinel C = junk/pad slot)
    loss_ref,   # (1, 1)      f32  : per-tile CE sum
    inter_ref,  # (C, 1)      f32  : per-tile per-class intersection
    union_ref,  # (C, 1)      f32  : per-tile per-class union
    *,
    th, wp2, c,
):
    tile = th * wp2

    # --- 3x3 conv as nine (C,Cin)x(Cin,tile) MXU matmuls over static lane-shifted taps ---
    acc = jnp.zeros((c, tile), jnp.float32)
    for kh in range(3):
        for kw in range(3):
            s = kh * wp2 + kw                       # static lane offset
            tap = x_ref[:, s:s + tile]              # (Cin, tile) bf16
            acc = acc + jnp.dot(w_ref[kh * 3 + kw], tap,
                                preferred_element_type=jnp.float32)
    logits = acc + b_ref[...]                       # (C, tile) f32, bias bcast over lanes

    # --- cross entropy + IoU on the VMEM-resident, lane-dense logits tile ---
    lbl = lbl_ref[...]                              # (1, tile) i32
    valid = lbl < c                                 # sentinel columns masked out
    cls = jax.lax.broadcasted_iota(jnp.int32, (c, tile), 0)
    onehot = (cls == lbl).astype(jnp.float32)       # all-zero column for junk pixels

    m = jnp.max(logits, axis=0, keepdims=True)                             # (1, tile)
    lse = jnp.log(jnp.sum(jnp.exp(logits - m), axis=0, keepdims=True)) + m
    x_at_lbl = jnp.sum(logits * onehot, axis=0, keepdims=True)
    ce = jnp.where(valid, lse - x_at_lbl, 0.0)                             # (1, tile)
    loss_ref[...] = jnp.sum(ce, axis=1, keepdims=True)                     # (1, 1)

    # argmax prediction, first-max-index tie-break (matches torch.argmax)
    is_max = logits == m
    pred = jnp.min(jnp.where(is_max, cls, c), axis=0, keepdims=True)       # (1, tile)
    pred_oh = jnp.logical_and(cls == pred, valid).astype(jnp.float32)      # (C, tile)

    inter_ref[...] = jnp.sum(pred_oh * onehot, axis=1, keepdims=True)          # (C, 1)
    union_ref[...] = jnp.sum(jnp.maximum(pred_oh, onehot), axis=1, keepdims=True)


# ----------------------------------------------------------------- wrapper --
def model_with_loss_forward(imgs_nchw, mask, w_conv, b_conv, *, th=None):
    """imgs_nchw: (B,Cin,H,W) f32; mask: (B,1,H,W) int class labels.

    Returns (losses, acc) == (mean CE loss, mean IoU), matching
    ModelWithLoss.forward semantics for the size-matched case.
    """
    B, Cin, H, W = imgs_nchw.shape
    C = w_conv.shape[0]

    Wp2 = W + 2                          # W + conv halo (2 junk slots per row)
    if th is None:
        # target ~2K pixels / grid step to amortize per-step pipeline overhead
        th = min(H, max(8, 2048 // Wp2))
    R = (H + th - 1) // th               # row tiles per image
    Hp = R * th                          # H padded up to a multiple of th
    TILE = th * Wp2                      # pixel slots per grid step
    Ls = (th + 2) * Wp2 + 8              # slab lanes (+ tail for tap-slice overrun)
    T = B * R                            # total tiles

    # Pad (1px conv halo + bottom rows up to Hp); channels-first stays native.
    xp = jnp.pad(imgs_nchw, ((0, 0), (0, 0), (1, 1 + Hp - H), (1, 1)))  # (B,Cin,Hp+2,Wp2)

    # Per-row-tile slabs with a 1-row halo (duplicates 2 rows per tile — the
    # only extra HBM traffic; no 9x im2col tensor). Pixels flattened so the
    # nine conv taps are contiguous static lane slices inside the kernel.
    slabs = jnp.stack([xp[:, :, r * th: r * th + th + 2, :] for r in range(R)],
                      axis=1)                                            # (B,R,Cin,th+2,Wp2)
    slabs = slabs.reshape(B, R, Cin, (th + 2) * Wp2)
    slabs = jnp.pad(slabs, ((0, 0), (0, 0), (0, 0), (0, 8)))
    slabs = slabs.astype(jnp.bfloat16)                                   # (B,R,Cin,Ls)

    # PyTorch weight (C, Cin, 3, 3) -> (kh, kw, C, Cin) -> (9, C, Cin) bf16.
    w = jnp.transpose(w_conv, (2, 3, 0, 1)).reshape(9, C, Cin).astype(jnp.bfloat16)
    bias = b_conv.reshape(C, 1).astype(jnp.float32)

    # Labels in the same (row, Wp2) lane order the kernel produces logits in;
    # junk columns / padded rows carry the sentinel class id C.
    lbl = mask.reshape(B, H, W).astype(jnp.int32)
    lbl = jnp.pad(lbl, ((0, 0), (0, Hp - H), (0, 2)), constant_values=C)
    lbl = lbl.reshape(T, 1, TILE)

    kernel = functools.partial(_fused_conv_loss_iou_kernel, th=th, wp2=Wp2, c=C)

    loss_p, inter_p, union_p = pl.pallas_call(
        kernel,
        out_shape=(
            jax.ShapeDtypeStruct((T, 1, 1), jnp.float32),
            jax.ShapeDtypeStruct((T, C, 1), jnp.float32),
            jax.ShapeDtypeStruct((T, C, 1), jnp.float32),
        ),
        grid_spec=pltpu.PrefetchScalarGridSpec(
            num_scalar_prefetch=0,
            grid=(B, R),
            in_specs=[
                pl.BlockSpec((None, None, Cin, Ls), lambda b, r: (b, r, 0, 0)),
                pl.BlockSpec((9, C, Cin), lambda b, r: (0, 0, 0)),
                pl.BlockSpec((C, 1), lambda b, r: (0, 0)),
                pl.BlockSpec((None, 1, TILE), lambda b, r: (b * R + r, 0, 0)),
            ],
            out_specs=(
                pl.BlockSpec((None, 1, 1), lambda b, r: (b * R + r, 0, 0)),
                pl.BlockSpec((None, C, 1), lambda b, r: (b * R + r, 0, 0)),
                pl.BlockSpec((None, C, 1), lambda b, r: (b * R + r, 0, 0)),
            ),
        ),
        compiler_params=pltpu.CompilerParams(
            # per-tile partial outputs -> no cross-step accumulator -> both
            # grid axes can shard across v7x's two TensorCores.
            dimension_semantics=("parallel", "parallel"),
        ),
    )(slabs, w, bias, lbl)

    # Combine per-tile partials in plain JAX (tree-sum, f32).
    n_pix = jnp.float32(B * H * W)
    loss = jnp.sum(loss_p) / n_pix                   # 'mean' reduction CE
    inter = jnp.sum(inter_p, axis=0)[:, 0]           # (C,)
    union = jnp.sum(union_p, axis=0)[:, 0]           # (C,)
    valid_cls = union > 0
    iou = jnp.where(valid_cls, inter / jnp.maximum(union, 1.0), 0.0)
    miou = jnp.sum(iou) / jnp.maximum(jnp.sum(valid_cls.astype(jnp.float32)), 1.0)
    return loss, miou


# ------------------------------------------------------------------- main --
if __name__ == "__main__":
    B, Cin, H, W = 2, 4, 16, 16
    NUM_CLASSES = 8

    key = jax.random.PRNGKey(0)
    k_img, k_mask, k_w, k_b = jax.random.split(key, 4)

    imgs = jax.random.normal(k_img, (B, Cin, H, W), dtype=jnp.float32)
    mask = jax.random.randint(k_mask, (B, 1, H, W), 0, NUM_CLASSES, dtype=jnp.int32)

    # Deterministic "model" params: Conv2d(Cin, NUM_CLASSES, 3, padding=1)
    w_conv = 0.1 * jax.random.normal(k_w, (NUM_CLASSES, Cin, 3, 3), dtype=jnp.float32)
    b_conv = 0.01 * jax.random.normal(k_b, (NUM_CLASSES,), dtype=jnp.float32)

    losses, acc = jax.jit(model_with_loss_forward)(imgs, mask, w_conv, b_conv)
    jax.block_until_ready((losses, acc))
    print("KERNEL_OK")
</pallas_src>

<mosaic_0001>
module attributes {stable_mosaic.version = 11 : i64} {
  func.func @_fused_conv_loss_iou_kernel(%arg0: i32, %arg1: i32, %arg2: memref<1x1x4x332xbf16, #tpu.memory_space<vmem>>, %arg3: memref<9x8x4xbf16, #tpu.memory_space<vmem>>, %arg4: memref<8x1xf32, #tpu.memory_space<vmem>>, %arg5: memref<1x1x288xi32, #tpu.memory_space<vmem>>, %arg6: memref<1x1x1xf32, #tpu.memory_space<vmem>>, %arg7: memref<1x8x1xf32, #tpu.memory_space<vmem>>, %arg8: memref<1x8x1xf32, #tpu.memory_space<vmem>>) attributes {dimension_semantics = [#tpu.dimension_semantics<parallel>, #tpu.dimension_semantics<parallel>], iteration_bounds = array<i64: 2, 1>, scalar_prefetch = 0 : i64, scratch_operands = 0 : i64, tpu.core_type = #tpu.core_type<tc>, window_params = [{transform_indices = @transform_0, window_bounds = array<i64: 1, 1, 4, 332>}, {pipeline_mode = #tpu.pipeline_mode<synchronous>, transform_indices = @transform_1, window_bounds = array<i64: 9, 8, 4>}, {pipeline_mode = #tpu.pipeline_mode<synchronous>, transform_indices = @transform_2, window_bounds = array<i64: 8, 1>}, {transform_indices = @transform_3, window_bounds = array<i64: 1, 1, 288>}, {transform_indices = @transform_4, window_bounds = array<i64: 1, 1, 1>}, {transform_indices = @transform_5, window_bounds = array<i64: 1, 8, 1>}, {transform_indices = @transform_6, window_bounds = array<i64: 1, 8, 1>}]} {
    %cst = arith.constant 0.000000e+00 : f32
    %0 = vector.broadcast %cst : f32 to vector<8x288xf32>
    %c0 = arith.constant 0 : index
    %c0_0 = arith.constant 0 : index
    %c0_1 = arith.constant 0 : index
    %c0_2 = arith.constant 0 : index
    %1 = vector.load %arg2[%c0, %c0_0, %c0_1, %c0_2] : memref<1x1x4x332xbf16, #tpu.memory_space<vmem>>, vector<1x1x4x288xbf16>
    %2 = vector.shape_cast %1 : vector<1x1x4x288xbf16> to vector<4x288xbf16>
    %c0_3 = arith.constant 0 : index
    %c0_4 = arith.constant 0 : index
    %c0_5 = arith.constant 0 : index
    %3 = vector.load %arg3[%c0_3, %c0_4, %c0_5] : memref<9x8x4xbf16, #tpu.memory_space<vmem>>, vector<1x8x4xbf16>
    %4 = vector.shape_cast %3 : vector<1x8x4xbf16> to vector<8x4xbf16>
    %cst_6 = arith.constant dense<0.000000e+00> : vector<8x288xf32>
    %5 = tpu.matmul %4, %2, %cst_6 {dimension_numbers = #tpu.dot_dimension_numbers<[1], [0], [0], [1], [0, 0, 1, 1], [], []>} : vector<8x4xbf16>, vector<4x288xbf16>, vector<8x288xf32> -> vector<8x288xf32>
    %6 = arith.addf %0, %5 : vector<8x288xf32>
    %c0_7 = arith.constant 0 : index
    %c0_8 = arith.constant 0 : index
    %c0_9 = arith.constant 0 : index
    %c1 = arith.constant 1 : index
    %7 = vector.load %arg2[%c0_7, %c0_8, %c0_9, %c1] : memref<1x1x4x332xbf16, #tpu.memory_space<vmem>>, vector<1x1x4x288xbf16>
    %8 = vector.shape_cast %7 : vector<1x1x4x288xbf16> to vector<4x288xbf16>
    %c1_10 = arith.constant 1 : index
    %c0_11 = arith.constant 0 : index
    %c0_12 = arith.constant 0 : index
    %9 = vector.load %arg3[%c1_10, %c0_11, %c0_12] : memref<9x8x4xbf16, #tpu.memory_space<vmem>>, vector<1x8x4xbf16>
    %10 = vector.shape_cast %9 : vector<1x8x4xbf16> to vector<8x4xbf16>
    %cst_13 = arith.constant dense<0.000000e+00> : vector<8x288xf32>
    %11 = tpu.matmul %10, %8, %cst_13 {dimension_numbers = #tpu.dot_dimension_numbers<[1], [0], [0], [1], [0, 0, 1, 1], [], []>} : vector<8x4xbf16>, vector<4x288xbf16>, vector<8x288xf32> -> vector<8x288xf32>
    %12 = arith.addf %6, %11 : vector<8x288xf32>
    %c0_14 = arith.constant 0 : index
    %c0_15 = arith.constant 0 : index
    %c0_16 = arith.constant 0 : index
    %c2 = arith.constant 2 : index
    %13 = vector.load %arg2[%c0_14, %c0_15, %c0_16, %c2] : memref<1x1x4x332xbf16, #tpu.memory_space<vmem>>, vector<1x1x4x288xbf16>
    %14 = vector.shape_cast %13 : vector<1x1x4x288xbf16> to vector<4x288xbf16>
    %c2_17 = arith.constant 2 : index
    %c0_18 = arith.constant 0 : index
    %c0_19 = arith.constant 0 : index
    %15 = vector.load %arg3[%c2_17, %c0_18, %c0_19] : memref<9x8x4xbf16, #tpu.memory_space<vmem>>, vector<1x8x4xbf16>
    %16 = vector.shape_cast %15 : vector<1x8x4xbf16> to vector<8x4xbf16>
    %cst_20 = arith.constant dense<0.000000e+00> : vector<8x288xf32>
    %17 = tpu.matmul %16, %14, %cst_20 {dimension_numbers = #tpu.dot_dimension_numbers<[1], [0], [0], [1], [0, 0, 1, 1], [], []>} : vector<8x4xbf16>, vector<4x288xbf16>, vector<8x288xf32> -> vector<8x288xf32>
    %18 = arith.addf %12, %17 : vector<8x288xf32>
    %c0_21 = arith.constant 0 : index
    %c0_22 = arith.constant 0 : index
    %c0_23 = arith.constant 0 : index
    %c18 = arith.constant 18 : index
    %19 = vector.load %arg2[%c0_21, %c0_22, %c0_23, %c18] : memref<1x1x4x332xbf16, #tpu.memory_space<vmem>>, vector<1x1x4x288xbf16>
    %20 = vector.shape_cast %19 : vector<1x1x4x288xbf16> to vector<4x288xbf16>
    %c3 = arith.constant 3 : index
    %c0_24 = arith.constant 0 : index
    %c0_25 = arith.constant 0 : index
    %21 = vector.load %arg3[%c3, %c0_24, %c0_25] : memref<9x8x4xbf16, #tpu.memory_space<vmem>>, vector<1x8x4xbf16>
    %22 = vector.shape_cast %21 : vector<1x8x4xbf16> to vector<8x4xbf16>
    %cst_26 = arith.constant dense<0.000000e+00> : vector<8x288xf32>
    %23 = tpu.matmul %22, %20, %cst_26 {dimension_numbers = #tpu.dot_dimension_numbers<[1], [0], [0], [1], [0, 0, 1, 1], [], []>} : vector<8x4xbf16>, vector<4x288xbf16>, vector<8x288xf32> -> vector<8x288xf32>
    %24 = arith.addf %18, %23 : vector<8x288xf32>
    %c0_27 = arith.constant 0 : index
    %c0_28 = arith.constant 0 : index
    %c0_29 = arith.constant 0 : index
    %c19 = arith.constant 19 : index
    %25 = vector.load %arg2[%c0_27, %c0_28, %c0_29, %c19] : memref<1x1x4x332xbf16, #tpu.memory_space<vmem>>, vector<1x1x4x288xbf16>
    %26 = vector.shape_cast %25 : vector<1x1x4x288xbf16> to vector<4x288xbf16>
    %c4 = arith.constant 4 : index
    %c0_30 = arith.constant 0 : index
    %c0_31 = arith.constant 0 : index
    %27 = vector.load %arg3[%c4, %c0_30, %c0_31] : memref<9x8x4xbf16, #tpu.memory_space<vmem>>, vector<1x8x4xbf16>
    %28 = vector.shape_cast %27 : vector<1x8x4xbf16> to vector<8x4xbf16>
    %cst_32 = arith.constant dense<0.000000e+00> : vector<8x288xf32>
    %29 = tpu.matmul %28, %26, %cst_32 {dimension_numbers = #tpu.dot_dimension_numbers<[1], [0], [0], [1], [0, 0, 1, 1], [], []>} : vector<8x4xbf16>, vector<4x288xbf16>, vector<8x288xf32> -> vector<8x288xf32>
    %30 = arith.addf %24, %29 : vector<8x288xf32>
    %c0_33 = arith.constant 0 : index
    %c0_34 = arith.constant 0 : index
    %c0_35 = arith.constant 0 : index
    %c20 = arith.constant 20 : index
    %31 = vector.load %arg2[%c0_33, %c0_34, %c0_35, %c20] : memref<1x1x4x332xbf16, #tpu.memory_space<vmem>>, vector<1x1x4x288xbf16>
    %32 = vector.shape_cast %31 : vector<1x1x4x288xbf16> to vector<4x288xbf16>
    %c5 = arith.constant 5 : index
    %c0_36 = arith.constant 0 : index
    %c0_37 = arith.constant 0 : index
    %33 = vector.load %arg3[%c5, %c0_36, %c0_37] : memref<9x8x4xbf16, #tpu.memory_space<vmem>>, vector<1x8x4xbf16>
    %34 = vector.shape_cast %33 : vector<1x8x4xbf16> to vector<8x4xbf16>
    %cst_38 = arith.constant dense<0.000000e+00> : vector<8x288xf32>
    %35 = tpu.matmul %34, %32, %cst_38 {dimension_numbers = #tpu.dot_dimension_numbers<[1], [0], [0], [1], [0, 0, 1, 1], [], []>} : vector<8x4xbf16>, vector<4x288xbf16>, vector<8x288xf32> -> vector<8x288xf32>
    %36 = arith.addf %30, %35 : vector<8x288xf32>
    %c0_39 = arith.constant 0 : index
    %c0_40 = arith.constant 0 : index
    %c0_41 = arith.constant 0 : index
    %c36 = arith.constant 36 : index
    %37 = vector.load %arg2[%c0_39, %c0_40, %c0_41, %c36] : memref<1x1x4x332xbf16, #tpu.memory_space<vmem>>, vector<1x1x4x288xbf16>
    %38 = vector.shape_cast %37 : vector<1x1x4x288xbf16> to vector<4x288xbf16>
    %c6 = arith.constant 6 : index
    %c0_42 = arith.constant 0 : index
    %c0_43 = arith.constant 0 : index
    %39 = vector.load %arg3[%c6, %c0_42, %c0_43] : memref<9x8x4xbf16, #tpu.memory_space<vmem>>, vector<1x8x4xbf16>
    %40 = vector.shape_cast %39 : vector<1x8x4xbf16> to vector<8x4xbf16>
    %cst_44 = arith.constant dense<0.000000e+00> : vector<8x288xf32>
    %41 = tpu.matmul %40, %38, %cst_44 {dimension_numbers = #tpu.dot_dimension_numbers<[1], [0], [0], [1], [0, 0, 1, 1], [], []>} : vector<8x4xbf16>, vector<4x288xbf16>, vector<8x288xf32> -> vector<8x288xf32>
    %42 = arith.addf %36, %41 : vector<8x288xf32>
    %c0_45 = arith.constant 0 : index
    %c0_46 = arith.constant 0 : index
    %c0_47 = arith.constant 0 : index
    %c37 = arith.constant 37 : index
    %43 = vector.load %arg2[%c0_45, %c0_46, %c0_47, %c37] : memref<1x1x4x332xbf16, #tpu.memory_space<vmem>>, vector<1x1x4x288xbf16>
    %44 = vector.shape_cast %43 : vector<1x1x4x288xbf16> to vector<4x288xbf16>
    %c7 = arith.constant 7 : index
    %c0_48 = arith.constant 0 : index
    %c0_49 = arith.constant 0 : index
    %45 = vector.load %arg3[%c7, %c0_48, %c0_49] : memref<9x8x4xbf16, #tpu.memory_space<vmem>>, vector<1x8x4xbf16>
    %46 = vector.shape_cast %45 : vector<1x8x4xbf16> to vector<8x4xbf16>
    %cst_50 = arith.constant dense<0.000000e+00> : vector<8x288xf32>
    %47 = tpu.matmul %46, %44, %cst_50 {dimension_numbers = #tpu.dot_dimension_numbers<[1], [0], [0], [1], [0, 0, 1, 1], [], []>} : vector<8x4xbf16>, vector<4x288xbf16>, vector<8x288xf32> -> vector<8x288xf32>
    %48 = arith.addf %42, %47 : vector<8x288xf32>
    %c0_51 = arith.constant 0 : index
    %c0_52 = arith.constant 0 : index
    %c0_53 = arith.constant 0 : index
    %c38 = arith.constant 38 : index
    %49 = vector.load %arg2[%c0_51, %c0_52, %c0_53, %c38] : memref<1x1x4x332xbf16, #tpu.memory_space<vmem>>, vector<1x1x4x288xbf16>
    %50 = vector.shape_cast %49 : vector<1x1x4x288xbf16> to vector<4x288xbf16>
    %c8 = arith.constant 8 : index
    %c0_54 = arith.constant 0 : index
    %c0_55 = arith.constant 0 : index
    %51 = vector.load %arg3[%c8, %c0_54, %c0_55] : memref<9x8x4xbf16, #tpu.memory_space<vmem>>, vector<1x8x4xbf16>
    %52 = vector.shape_cast %51 : vector<1x8x4xbf16> to vector<8x4xbf16>
    %cst_56 = arith.constant dense<0.000000e+00> : vector<8x288xf32>
    %53 = tpu.matmul %52, %50, %cst_56 {dimension_numbers = #tpu.dot_dimension_numbers<[1], [0], [0], [1], [0, 0, 1, 1], [], []>} : vector<8x4xbf16>, vector<4x288xbf16>, vector<8x288xf32> -> vector<8x288xf32>
    %54 = arith.addf %48, %53 : vector<8x288xf32>
    %c0_57 = arith.constant 0 : index
    %c0_58 = arith.constant 0 : index
    %55 = vector.load %arg4[%c0_57, %c0_58] : memref<8x1xf32, #tpu.memory_space<vmem>>, vector<8x1xf32>
    %56 = vector.broadcast %55 : vector<8x1xf32> to vector<8x288xf32>
    %57 = arith.addf %54, %56 : vector<8x288xf32>
    %c0_59 = arith.constant 0 : index
    %c0_60 = arith.constant 0 : index
    %c0_61 = arith.constant 0 : index
    %58 = vector.load %arg5[%c0_59, %c0_60, %c0_61] : memref<1x1x288xi32, #tpu.memory_space<vmem>>, vector<1x1x288xi32>
    %59 = vector.shape_cast %58 : vector<1x1x288xi32> to vector<1x288xi32>
    %c8_i32 = arith.constant 8 : i32
    %60 = vector.broadcast %c8_i32 : i32 to vector<1x288xi32>
    %61 = arith.cmpi slt, %59, %60 : vector<1x288xi32>
    %62 = tpu.iota {dimensions = array<i32: 0>} : vector<8x288xi32>
    %63 = vector.broadcast %59 : vector<1x288xi32> to vector<8x288xi32>
    %64 = arith.cmpi eq, %62, %63 : vector<8x288xi32>
    %65 = arith.extui %64 : vector<8x288xi1> to vector<8x288xi32>
    %66 = arith.sitofp %65 : vector<8x288xi32> to vector<8x288xf32>
    %cst_62 = arith.constant dense<0xFF800000> : vector<288xf32>
    %67 = vector.multi_reduction <maximumf>, %57, %cst_62 [0] : vector<8x288xf32> to vector<288xf32>
    %68 = vector.shape_cast %67 : vector<288xf32> to vector<1x288xf32>
    %69 = vector.broadcast %68 : vector<1x288xf32> to vector<8x288xf32>
    %70 = arith.subf %57, %69 : vector<8x288xf32>
    %71 = math.exp %70 : vector<8x288xf32>
    %cst_63 = arith.constant dense<0.000000e+00> : vector<288xf32>
    %72 = vector.multi_reduction <add>, %71, %cst_63 [0] : vector<8x288xf32> to vector<288xf32>
    %73 = vector.shape_cast %72 : vector<288xf32> to vector<1x288xf32>
    %74 = math.log %73 : vector<1x288xf32>
    %75 = arith.addf %74, %68 : vector<1x288xf32>
    %76 = arith.mulf %57, %66 : vector<8x288xf32>
    %cst_64 = arith.constant dense<0.000000e+00> : vector<288xf32>
    %77 = vector.multi_reduction <add>, %76, %cst_64 [0] : vector<8x288xf32> to vector<288xf32>
    %78 = vector.shape_cast %77 : vector<288xf32> to vector<1x288xf32>
    %79 = arith.subf %75, %78 : vector<1x288xf32>
    %cst_65 = arith.constant 0.000000e+00 : f32
    %80 = vector.broadcast %cst_65 : f32 to vector<1x288xf32>
    %81 = arith.select %61, %79, %80 : vector<1x288xi1>, vector<1x288xf32>
    %cst_66 = arith.constant dense<0.000000e+00> : vector<1xf32>
    %82 = vector.multi_reduction <add>, %81, %cst_66 [1] : vector<1x288xf32> to vector<1xf32>
    %83 = vector.shape_cast %82 : vector<1xf32> to vector<1x1xf32>
    %c0_67 = arith.constant 0 : index
    %c0_68 = arith.constant 0 : index
    %c0_69 = arith.constant 0 : index
    %84 = vector.load %arg6[%c0_67, %c0_68, %c0_69] : memref<1x1x1xf32, #tpu.memory_space<vmem>>, vector<1x1x1xf32>
    %85 = vector.shape_cast %84 : vector<1x1x1xf32> to vector<1x1xf32>
    %86 = vector.shape_cast %83 : vector<1x1xf32> to vector<1x1x1xf32>
    tpu.vector_store %arg6[%c0_67, %c0_68, %c0_69], %86 {strides = array<i32>} : memref<1x1x1xf32, #tpu.memory_space<vmem>>, vector<1x1x1xf32>,
    %87 = vector.broadcast %68 : vector<1x288xf32> to vector<8x288xf32>
    %88 = arith.cmpf oeq, %57, %87 : vector<8x288xf32>
    %c8_i32_70 = arith.constant 8 : i32
    %89 = vector.broadcast %c8_i32_70 : i32 to vector<8x288xi32>
    %90 = arith.select %88, %62, %89 : vector<8x288xi1>, vector<8x288xi32>
    %cst_71 = arith.constant dense<2147483647> : vector<288xi32>
    %91 = vector.multi_reduction <minsi>, %90, %cst_71 [0] : vector<8x288xi32> to vector<288xi32>
    %92 = vector.shape_cast %91 : vector<288xi32> to vector<1x288xi32>
    %93 = vector.broadcast %92 : vector<1x288xi32> to vector<8x288xi32>
    %94 = arith.cmpi eq, %62, %93 : vector<8x288xi32>
    %95 = vector.broadcast %61 : vector<1x288xi1> to vector<8x288xi1>
    %96 = arith.andi %94, %95 : vector<8x288xi1>
    %97 = arith.extui %96 : vector<8x288xi1> to vector<8x288xi32>
    %98 = arith.sitofp %97 : vector<8x288xi32> to vector<8x288xf32>
    %99 = arith.mulf %98, %66 : vector<8x288xf32>
    %cst_72 = arith.constant dense<0.000000e+00> : vector<8xf32>
    %100 = vector.multi_reduction <add>, %99, %cst_72 [1] : vector<8x288xf32> to vector<8xf32>
    %101 = vector.shape_cast %100 : vector<8xf32> to vector<8x1xf32>
    %c0_73 = arith.constant 0 : index
    %c0_74 = arith.constant 0 : index
    %c0_75 = arith.constant 0 : index
    %102 = vector.load %arg7[%c0_73, %c0_74, %c0_75] : memref<1x8x1xf32, #tpu.memory_space<vmem>>, vector<1x8x1xf32>
    %103 = vector.shape_cast %102 : vector<1x8x1xf32> to vector<8x1xf32>
    %104 = vector.shape_cast %101 : vector<8x1xf32> to vector<1x8x1xf32>
    tpu.vector_store %arg7[%c0_73, %c0_74, %c0_75], %104 {strides = array<i32>} : memref<1x8x1xf32, #tpu.memory_space<vmem>>, vector<1x8x1xf32>,
    %105 = arith.maximumf %98, %66 : vector<8x288xf32>
    %cst_76 = arith.constant dense<0.000000e+00> : vector<8xf32>
    %106 = vector.multi_reduction <add>, %105, %cst_76 [1] : vector<8x288xf32> to vector<8xf32>
    %107 = vector.shape_cast %106 : vector<8xf32> to vector<8x1xf32>
    %c0_77 = arith.constant 0 : index
    %c0_78 = arith.constant 0 : index
    %c0_79 = arith.constant 0 : index
    %108 = vector.load %arg8[%c0_77, %c0_78, %c0_79] : memref<1x8x1xf32, #tpu.memory_space<vmem>>, vector<1x8x1xf32>
    %109 = vector.shape_cast %108 : vector<1x8x1xf32> to vector<8x1xf32>
    %110 = vector.shape_cast %107 : vector<8x1xf32> to vector<1x8x1xf32>
    tpu.vector_store %arg8[%c0_77, %c0_78, %c0_79], %110 {strides = array<i32>} : memref<1x8x1xf32, #tpu.memory_space<vmem>>, vector<1x8x1xf32>,
    return
  }
  func.func @transform_0(%arg0: i32, %arg1: i32) -> (i32, i32, i32, i32) {
    %c0_i32 = arith.constant 0 : i32
    %c0_i32_0 = arith.constant 0 : i32
    %c0_i32_1 = arith.constant 0 : i32
    return %arg0, %arg1, %c0_i32, %c0_i32_0 : i32, i32, i32, i32
  }
  func.func @transform_1(%arg0: i32, %arg1: i32) -> (i32, i32, i32) {
    %c0_i32 = arith.constant 0 : i32
    %c0_i32_0 = arith.constant 0 : i32
    %c0_i32_1 = arith.constant 0 : i32
    %c0_i32_2 = arith.constant 0 : i32
    return %c0_i32, %c0_i32_0, %c0_i32_1 : i32, i32, i32
  }
  func.func @transform_2(%arg0: i32, %arg1: i32) -> (i32, i32) {
    %c0_i32 = arith.constant 0 : i32
    %c0_i32_0 = arith.constant 0 : i32
    %c0_i32_1 = arith.constant 0 : i32
    return %c0_i32, %c0_i32_0 : i32, i32
  }
  func.func @transform_3(%arg0: i32, %arg1: i32) -> (i32, i32, i32) {
    %c1_i32 = arith.constant 1 : i32
    %0 = arith.muli %arg0, %c1_i32 : i32
    %1 = arith.addi %0, %arg1 : i32
    %c0_i32 = arith.constant 0 : i32
    %c0_i32_0 = arith.constant 0 : i32
    %c0_i32_1 = arith.constant 0 : i32
    return %1, %c0_i32, %c0_i32_0 : i32, i32, i32
  }
  func.func @transform_4(%arg0: i32, %arg1: i32) -> (i32, i32, i32) {
    %c1_i32 = arith.constant 1 : i32
    %0 = arith.muli %arg0, %c1_i32 : i32
    %1 = arith.addi %0, %arg1 : i32
    %c0_i32 = arith.constant 0 : i32
    %c0_i32_0 = arith.constant 0 : i32
    %c0_i32_1 = arith.constant 0 : i32
    return %1, %c0_i32, %c0_i32_0 : i32, i32, i32
  }
  func.func @transform_5(%arg0: i32, %arg1: i32) -> (i32, i32, i32) {
    %c1_i32 = arith.constant 1 : i32
    %0 = arith.muli %arg0, %c1_i32 : i32
    %1 = arith.addi %0, %arg1 : i32
    %c0_i32 = arith.constant 0 : i32
    %c0_i32_0 = arith.constant 0 : i32
    %c0_i32_1 = arith.constant 0 : i32
    return %1, %c0_i32, %c0_i32_0 : i32, i32, i32
  }
  func.func @transform_6(%arg0: i32, %arg1: i32) -> (i32, i32, i32) {
    %c1_i32 = arith.constant 1 : i32
    %0 = arith.muli %arg0, %c1_i32 : i32
    %1 = arith.addi %0, %arg1 : i32
    %c0_i32 = arith.constant 0 : i32
    %c0_i32_0 = arith.constant 0 : i32
    %c0_i32_1 = arith.constant 0 : i32
    return %1, %c0_i32, %c0_i32_0 : i32, i32, i32
  }
}

</mosaic_0001>

<llo_original>
// kernel: model_with_loss_forward.1
$region0: #{model_with_loss_forward.1}
  #allocation0 [shape = 'u32[]', space=smem, size = 0x4, offset = 0x4, fixed_abs, tag = 'smem constant byte address 0x4 - core index']
  #allocation1 [shape = 'u32[72,128]{1,0:T(1,128)}', space=vmem, size = 0x9000, scoped, tag = 'internal scratch']
  %s0 = inlined_call_operand.vmem [shape: bf16[2,1,4,332], index: 0, kind: input, shape index: {}]
  %s1 = inlined_call_operand.vmem [shape: bf16[9,8,4], index: 1, kind: input, shape index: {}]
  %s2 = inlined_call_operand.vmem [shape: f32[8,1], index: 2, kind: input, shape index: {}]
  %s3 = inlined_call_operand.vmem [shape: s32[2,1,288], index: 3, kind: input, shape index: {}]
  %s4 = inlined_call_operand.vmem [shape: f32[2,1,1], index: 4, kind: output, shape index: {0}]
  %s5 = inlined_call_operand.vmem [shape: f32[2,8,1], index: 5, kind: output, shape index: {1}]
  %s6 = inlined_call_operand.vmem [shape: f32[2,8,1], index: 6, kind: output, shape index: {2}]
  %7 = xla_tuple %s4, %s5, %s6
  %s8 = sld [smem:[#allocation0]]
  $region65: #{model_with_loss_forward.1} parent=0
    _
  %s10 = ssub.s32 1, %s8
  %s11 = scalar_select 0, %s10, %s8
  loop: start=0, step=1, limit=4
  $region2: #{model_with_loss_forward.1} parent=0 // loop_pre_header
    _
  $region3: #{model_with_loss_forward.1} parent=0 // loop_header
    %s13 = sphi 0, %s17
    %p14 = scmp.ge.s32.totalorder %s13, 4
    %s20 = sphi 0, %s32
    %s21 = sphi 0, %s28
    %s22 = sphi 0, %s20
    %s23 = sphi 0, %s21
    %s24 = sphi 0, %s22
    %s25 = sphi 0, %s23
    %s37 = sphi 0, %s39
    %s40 = sphi 0, %s37
    %s41 = sphi 0, %s40
    %s57 = sphi 0, %s41
    %s61 = sphi 0, %s61
    %s63 = sphi 0, %s61
    %s64 = sphi 0, %s63
    %s78 = sphi 0, %s64
    %s82 = sphi 0, %s82
    %s84 = sphi 0, %s82
    %s85 = sphi 0, %s84
    %s99 = sphi 0, %s85
    %s107 = sphi 0, %s109
    %s110 = sphi 0, %s107
    %s111 = sphi 0, %s110
    %s127 = sphi 0, %s111
    %s135 = sphi 0, %s137
    %s138 = sphi 0, %s135
    %s139 = sphi 0, %s138
    %s155 = sphi 0, %s139
    %s163 = sphi 0, %s165
    %s166 = sphi 0, %s163
    %s167 = sphi 0, %s166
    %s183 = sphi 0, %s167
    %s191 = sphi 0, %s193
    %s194 = sphi 0, %s191
    %s195 = sphi 0, %s194
    %s211 = sphi 0, %s195
  $region4: #{model_with_loss_forward.1} parent=0 // loop_header_branch
    %16 = sbr.rel (%p14) target = $region8
  $region5: #{model_with_loss_forward.1} parent=0 // loop_body
    %s18 = ssub.s32 %s13, 1
    %s19 = ssub.s32 %s13, 2
    %s26 = sadd.s32 1, %s21
    %p27 = scmp.ge.s32.totalorder %s26, 1
    %s28 = scalar_select %p27, 0, %s26
    %s29 = sadd.s32 1, %s20
    %s30 = scalar_select %p27, %s29, %s20
    %p31 = scmp.ge.s32.totalorder %s30, 2
    %s32 = scalar_select %p31, 0, %s30
    %s33 = ssub.s32 %s20, %s32
    %s34 = ssub.s32 %s21, %s28
    %s35 = sor.u32 %s33, %s34
    %p36 = scmp.eq.s32.totalorder %s35, 0
    %s38 = sadd.s32 %s37, 1
    %s39 = scalar_select %p36, %s37, %s38
    %p42 = pneg %p36
    %p43 = scmp.eq.s32.totalorder %s13, 1
    %p44 = por %p42, %p43
    %p45 = scmp.ne.s32.totalorder %s37, %s40
    %p46 = scmp.eq.s32.totalorder %s13, 0
    %p47 = por %p45, %p46
    %p48 = scmp.ne.s32.totalorder %s37, %s40
    %p49 = scmp.eq.s32.totalorder %s18, 1
    %p50 = por %p48, %p49
    %p51 = scmp.ne.s32.totalorder %s40, %s41
    %p52 = scmp.eq.s32.totalorder %s18, 0
    %p53 = por %p51, %p52
    %p54 = scmp.ne.s32.totalorder %s40, %s41
    %p55 = scmp.eq.s32.totalorder %s19, 1
    %p56 = por %p54, %p55
    %p58 = scmp.ne.s32.totalorder %s41, %s57
    %p59 = scmp.eq.s32.totalorder %s19, 0
    %p60 = por %p58, %p59
    %s62 = sadd.s32 %s61, 1
    %p65 = scmp.eq.s32.totalorder %s13, 1
    %p66 = scmp.ne.s32.totalorder %s61, %s63
    %p67 = scmp.eq.s32.totalorder %s13, 0
    %p68 = por %p66, %p67
    %p69 = scmp.ne.s32.totalorder %s61, %s63
    %p70 = scmp.eq.s32.totalorder %s18, 1
    %p71 = por %p69, %p70
    %p72 = scmp.ne.s32.totalorder %s63, %s64
    %p73 = scmp.eq.s32.totalorder %s18, 0
    %p74 = por %p72, %p73
    %p75 = scmp.ne.s32.totalorder %s63, %s64
    %p76 = scmp.eq.s32.totalorder %s19, 1
    %p77 = por %p75, %p76
    %p79 = scmp.ne.s32.totalorder %s64, %s78
    %p80 = scmp.eq.s32.totalorder %s19, 0
    %p81 = por %p79, %p80
    %s83 = sadd.s32 %s82, 1
    %p86 = scmp.eq.s32.totalorder %s13, 1
    %p87 = scmp.ne.s32.totalorder %s82, %s84
    %p88 = scmp.eq.s32.totalorder %s13, 0
    %p89 = por %p87, %p88
    %p90 = scmp.ne.s32.totalorder %s82, %s84
    %p91 = scmp.eq.s32.totalorder %s18, 1
    %p92 = por %p90, %p91
    %p93 = scmp.ne.s32.totalorder %s84, %s85
    %p94 = scmp.eq.s32.totalorder %s18, 0
    %p95 = por %p93, %p94
    %p96 = scmp.ne.s32.totalorder %s84, %s85
    %p97 = scmp.eq.s32.totalorder %s19, 1
    %p98 = por %p96, %p97
    %p100 = scmp.ne.s32.totalorder %s85, %s99
    %p101 = scmp.eq.s32.totalorder %s19, 0
    %p102 = por %p100, %p101
    %s103 = sadd.s32 %s20, %s21
    %s104 = sadd.s32 %s32, %s28
    %s105 = ssub.s32 %s103, %s104
    %p106 = scmp.eq.s32.totalorder %s105, 0
    %s108 = sadd.s32 %s107, 1
    %s109 = scalar_select %p106, %s107, %s108
    %p112 = pneg %p106
    %p113 = scmp.eq.s32.totalorder %s13, 1
    %p114 = por %p112, %p113
    %p115 = scmp.ne.s32.totalorder %s107, %s110
    %p116 = scmp.eq.s32.totalorder %s13, 0
    %p117 = por %p115, %p116
    %p118 = scmp.ne.s32.totalorder %s107, %s110
    %p119 = scmp.eq.s32.totalorder %s18, 1
    %p120 = por %p118, %p119
    %p121 = scmp.ne.s32.totalorder %s110, %s111
    %p122 = scmp.eq.s32.totalorder %s18, 0
    %p123 = por %p121, %p122
    %p124 = scmp.ne.s32.totalorder %s110, %s111
    %p125 = scmp.eq.s32.totalorder %s19, 1
    %p126 = por %p124, %p125
    %p128 = scmp.ne.s32.totalorder %s111, %s127
    %p129 = scmp.eq.s32.totalorder %s19, 0
    %p130 = por %p128, %p129
    %s131 = sadd.s32 %s20, %s21
    %s132 = sadd.s32 %s32, %s28
    %s133 = ssub.s32 %s131, %s132
    %p134 = scmp.eq.s32.totalorder %s133, 0
    %s136 = sadd.s32 %s135, 1
    %s137 = scalar_select %p134, %s135, %s136
    %p140 = pneg %p134
    %p141 = scmp.eq.s32.totalorder %s13, 1
    %p142 = por %p140, %p141
    %p143 = scmp.ne.s32.totalorder %s135, %s138
    %p144 = scmp.eq.s32.totalorder %s13, 0
    %p145 = por %p143, %p144
    %p146 = scmp.ne.s32.totalorder %s135, %s138
    %p147 = scmp.eq.s32.totalorder %s18, 1
    %p148 = por %p146, %p147
    %p149 = scmp.ne.s32.totalorder %s138, %s139
    %p150 = scmp.eq.s32.totalorder %s18, 0
    %p151 = por %p149, %p150
    %p152 = scmp.ne.s32.totalorder %s138, %s139
    %p153 = scmp.eq.s32.totalorder %s19, 1
    %p154 = por %p152, %p153
    %p156 = scmp.ne.s32.totalorder %s139, %s155
    %p157 = scmp.eq.s32.totalorder %s19, 0
    %p158 = por %p156, %p157
    %s159 = sadd.s32 %s20, %s21
    %s160 = sadd.s32 %s32, %s28
    %s161 = ssub.s32 %s159, %s160
    %p162 = scmp.eq.s32.totalorder %s161, 0
    %s164 = sadd.s32 %s163, 1
    %s165 = scalar_select %p162, %s163, %s164
    %p168 = pneg %p162
    %p169 = scmp.eq.s32.totalorder %s13, 1
    %p170 = por %p168, %p169
    %p171 = scmp.ne.s32.totalorder %s163, %s166
    %p172 = scmp.eq.s32.totalorder %s13, 0
    %p173 = por %p171, %p172
    %p174 = scmp.ne.s32.totalorder %s163, %s166
    %p175 = scmp.eq.s32.totalorder %s18, 1
    %p176 = por %p174, %p175
    %p177 = scmp.ne.s32.totalorder %s166, %s167
    %p178 = scmp.eq.s32.totalorder %s18, 0
    %p179 = por %p177, %p178
    %p180 = scmp.ne.s32.totalorder %s166, %s167
    %p181 = scmp.eq.s32.totalorder %s19, 1
    %p182 = por %p180, %p181
    %p184 = scmp.ne.s32.totalorder %s167, %s183
    %p185 = scmp.eq.s32.totalorder %s19, 0
    %p186 = por %p184, %p185
    %s187 = sadd.s32 %s20, %s21
    %s188 = sadd.s32 %s32, %s28
    %s189 = ssub.s32 %s187, %s188
    %p190 = scmp.eq.s32.totalorder %s189, 0
    %s192 = sadd.s32 %s191, 1
    %s193 = scalar_select %p190, %s191, %s192
    %p196 = pneg %p190
    %p197 = scmp.eq.s32.totalorder %s13, 1
    %p198 = por %p196, %p197
    %p199 = scmp.ne.s32.totalorder %s191, %s194
    %p200 = scmp.eq.s32.totalorder %s13, 0
    %p201 = por %p199, %p200
    %p202 = scmp.ne.s32.totalorder %s191, %s194
    %p203 = scmp.eq.s32.totalorder %s18, 1
    %p204 = por %p202, %p203
    %p205 = scmp.ne.s32.totalorder %s194, %s195
    %p206 = scmp.eq.s32.totalorder %s18, 0
    %p207 = por %p205, %p206
    %p208 = scmp.ne.s32.totalorder %s194, %s195
    %p209 = scmp.eq.s32.totalorder %s19, 1
    %p210 = por %p208, %p209
    %p212 = scmp.ne.s32.totalorder %s195, %s211
    %p213 = scmp.eq.s32.totalorder %s19, 0
    %p214 = por %p212, %p213
    %p215 = scmp.le.s32.totalorder 1, %s13
    %p216 = scmp.lt.s32.totalorder %s13, 3
    %p217 = pnand %p215, %p216
    %p218 = pneg %p217
    // Predicated region
    $region9: #{model_with_loss_forward.1} parent=5 // pred_check
      _
    $region10: #{model_with_loss_forward.1} parent=5 // pred_check_branch
      %220 = sbr.rel (%p217) target = $region12
    $region11: #{model_with_loss_forward.1} parent=5 // pred_region
      %s221 = ssub.s32 %s13, 1
      // Predicated region
      $region13: #{model_with_loss_forward.1} parent=11 // pred_check
        %p222 = pneg %p74
      $region14: #{model_with_loss_forward.1} parent=11 // pred_check_branch
        %224 = sbr.rel (%p222) target = $region16
      $region15: #{model_with_loss_forward.1} parent=11 // pred_region
        _
      $region16: #{model_with_loss_forward.1} parent=11 // pred_fallthru
        _
      // Predicated region
      $region17: #{model_with_loss_forward.1} parent=11 // pred_check
        %p225 = pneg %p95
      $region18: #{model_with_loss_forward.1} parent=11 // pred_check_branch
        %227 = sbr.rel (%p225) target = $region20
      $region19: #{model_with_loss_forward.1} parent=11 // pred_region
        _
      $region20: #{model_with_loss_forward.1} parent=11 // pred_fallthru
        _
    $region12: #{model_with_loss_forward.1} parent=5 // pred_fallthru
      _
    %p228 = scmp.lt.s32.totalorder %s13, 2
    // Predicated region
    $region21: #{model_with_loss_forward.1} parent=5 // pred_check
      %p229 = pneg %p228
    $region22: #{model_with_loss_forward.1} parent=5 // pred_check_branch
      %231 = sbr.rel (%p229) target = $region24
    $region23: #{model_with_loss_forward.1} parent=5 // pred_region
      // Predicated region
      $region25: #{model_with_loss_forward.1} parent=23 // pred_check
        %p232 = pneg %p47
      $region26: #{model_with_loss_forward.1} parent=23 // pred_check_branch
        %234 = sbr.rel (%p232) target = $region28
      $region27: #{model_with_loss_forward.1} parent=23 // pred_region
        %p235 = scmp.lt.s32.totalorder %s20, 1
        %s236 = scalar_select %p235, %s20, 1
        %p237 = scmp.lt.s32.totalorder %s21, 0
        %s238 = scalar_select %p237, %s21, 0
        %s239 = smul.addr %s238, 3
        %s240 = smul.addr %s236, 3
        %s241 = sadd.s32 %s239, %s240
        %s242 = smul.addr %s241, 2
        %s243 = scalar_lea.vmem %s0, %s242
      $region28: #{model_with_loss_forward.1} parent=23 // pred_fallthru
        _
      // Predicated region
      $region29: #{model_with_loss_forward.1} parent=23 // pred_check
        %p244 = pneg %p117
      $region30: #{model_with_loss_forward.1} parent=23 // pred_check_branch
        %246 = sbr.rel (%p244) target = $region32
      $region31: #{model_with_loss_forward.1} parent=23 // pred_region
        %s247 = sadd.s32 %s20, %s21
        %p248 = scmp.lt.s32.totalorder %s247, 1
        %s249 = scalar_select %p248, %s247, 1
        %s250 = smul.addr %s249, 3
        %s251 = scalar_lea.vmem %s3, %s250
        %s252 = sadd.s32 %s20, %s21
      $region32: #{model_with_loss_forward.1} parent=23 // pred_fallthru
        _
    $region24: #{model_with_loss_forward.1} parent=5 // pred_fallthru
      _
    %p253 = scmp.le.s32.totalorder 1, %s13
    %p254 = scmp.lt.s32.totalorder %s13, 3
    %p255 = pnand %p253, %p254
    %p256 = pneg %p255
    // Predicated region
    $region33: #{model_with_loss_forward.1} parent=5 // pred_check
      _
    $region34: #{model_with_loss_forward.1} parent=5 // pred_check_branch
      %258 = sbr.rel (%p255) target = $region36
    $region35: #{model_with_loss_forward.1} parent=5 // pred_region
      %s259 = ssub.s32 %s13, 1
      %p260 = scmp.lt.s32.totalorder %s22, 1
      %s261 = scalar_select %p260, %s22, 1
      %p262 = scmp.lt.s32.totalorder %s23, 0
      %s263 = scalar_select %p262, %s23, 0
      %s264 = smul.addr %s263, 3
      %s265 = smul.addr %s261, 3
      %s266 = sadd.s32 %s264, %s265
      %s267 = smul.addr %s266, 2
      %s268 = scalar_lea.vmem %s0, %s267
      %p269 = pneg %p53
      %p270 = pneg %p50
      %p271 = pneg %p74
      %p272 = pneg %p71
      %p273 = pneg %p95
      %p274 = pneg %p92
      %s275 = sadd.s32 %s22, %s23
      %p276 = scmp.lt.s32.totalorder %s275, 1
      %s277 = scalar_select %p276, %s275, 1
      %s278 = smul.addr %s277, 3
      %s279 = scalar_lea.vmem %s3, %s278
      %p280 = pneg %p123
      %p281 = pneg %p120
      %p282 = pneg %p151
      %p283 = pneg %p148
      %s284 = sadd.s32 %s22, %s23
      %p285 = scmp.lt.s32.totalorder %s284, 1
      %s286 = scalar_select %p285, %s284, 1
      %s287 = scalar_lea.vmem %s4, %s286
      %p288 = pneg %p179
      %p289 = pneg %p176
      %s290 = sadd.s32 %s22, %s23
      %p291 = scmp.lt.s32.totalorder %s290, 1
      %s292 = scalar_select %p291, %s290, 1
      %s293 = smul.addr %s292, 8
      %s294 = scalar_lea.vmem %s5, %s293
      %p295 = pneg %p207
      %p296 = pneg %p204
      %s297 = sadd.s32 %s22, %s23
      %p298 = scmp.lt.s32.totalorder %s297, 1
      %s299 = scalar_select %p298, %s297, 1
      %s300 = smul.addr %s299, 8
      %s301 = scalar_lea.vmem %s6, %s300
      %p302 = scmp.lt.s32.totalorder %s22, 1
      %s303 = scalar_select %p302, %s22, 1
      %p304 = scmp.lt.s32.totalorder %s23, 0
      %s305 = scalar_select %p304, %s23, 0
      %s306 = smul.addr %s305, 3
      %s307 = smul.addr %s303, 3
      %s308 = sadd.s32 %s306, %s307
      %s309 = smul.addr %s308, 2
      %s310 = scalar_lea.vmem %s0, %s309
      %s311 = sadd.s32 %s22, %s23
      %p312 = scmp.lt.s32.totalorder %s311, 1
      %s313 = scalar_select %p312, %s311, 1
      %s314 = smul.addr %s313, 3
      %s315 = scalar_lea.vmem %s3, %s314
      %s316 = sadd.s32 %s22, %s23
      %s317 = sadd.s32 %s22, %s23
      %p318 = scmp.lt.s32.totalorder %s317, 1
      %s319 = scalar_select %p318, %s317, 1
      %s320 = scalar_lea.vmem %s4, %s319
      %s321 = sadd.s32 %s22, %s23
      %s322 = sadd.s32 %s22, %s23
      %p323 = scmp.lt.s32.totalorder %s322, 1
      %s324 = scalar_select %p323, %s322, 1
      %s325 = smul.addr %s324, 8
      %s326 = scalar_lea.vmem %s5, %s325
      %s327 = sadd.s32 %s22, %s23
      %s328 = sadd.s32 %s22, %s23
      %p329 = scmp.lt.s32.totalorder %s328, 1
      %s330 = scalar_select %p329, %s328, 1
      %s331 = smul.addr %s330, 8
      %s332 = scalar_lea.vmem %s6, %s331
      %s333 = sadd.s32 %s22, %s23
      %v335 = vld [vmem:[%s310] sm:$0x3f]
      %v336 = vld [vmem:[%s1] sm:$0xf]
      %s337 = scalar_lea.vmem %s1, 4
      %v338 = vld [vmem:[%s337] sm:$0xf]
      %340 = vst [vmem:[#allocation1] ss:$4 sm:$0xff] %v335
      %v341 = vld.sshfl [vmem:[#allocation1] sm:$0xff pattern:$0x73625140]
      %v343 = vld.sshfl [vmem:[#allocation1 + $0x8] sm:$0xff pattern:$0x73625140]
      %v345 = vld.sshfl [vmem:[#allocation1 + $0x10] sm:$0xff pattern:$0x73625140]
      %347 = vrot.lane.b32.xlu0 %v341, 127
      %v348 = vpop.permute.xlu0 %347
      %349 = vrot.lane.b32.xlu0 %v343, 127
      %v350 = vpop.permute.xlu0 %349
      %351 = vrot.lane.b32.xlu0 %v345, 127
      %v352 = vpop.permute.xlu0 %351
      %vm353 = vcmask 1039360
      %v354 = vsel %vm353, %v348, %v350
      %v355 = vsel %vm353, %v350, %v352
      %vm356 = vcmask 31744
      %v358 = vsel %vm356, %v338, 0
      %vm360 = vcmask 1041408
      %v362 = vsel %vm360, %v354, 0
      %v365 = vsel %vm360, %v355, 0
      %v368 = vsel %vm360, %v352, 0
      %370 = vmatpush.bf16.msra.mxu0 0
      %371 = vmatpush.bf16.msra.mxu0 0
      %372 = vmatpush.bf16.msra.mxu0 0
      %373 = vmatpush.bf16.msra.mxu0 0
      %374 = vmatpush.bf16.msra.mxu0 0
      %375 = vmatpush.bf16.msra.mxu0 0
      %376 = vmatpush.bf16.msra.mxu0 0
      %377 = vmatpush.bf16.msra.mxu0 %v362
      %378 = vmatmul.bf16.gmra.mxu0 %v358
      %v379 = vpop.f32.mrf.mxu0
      %v380 = vadd.f32 0.0, %v379
      %v381 = vpop.f32.mrf.mxu0
      %382 = vdwg.mxu0
      %383 = vmatpush.bf16.msra.mxu0 0
      %384 = vmatpush.bf16.msra.mxu0 0
      %385 = vmatpush.bf16.msra.mxu0 0
      %386 = vmatpush.bf16.msra.mxu0 0
      %387 = vmatpush.bf16.msra.mxu0 0
      %388 = vmatpush.bf16.msra.mxu0 0
      %389 = vmatpush.bf16.msra.mxu0 0
      %390 = vmatpush.bf16.msra.mxu0 %v365
      %391 = vmatmul.bf16.gmra.mxu0 %v358
      %v392 = vpop.f32.mrf.mxu0
      %v393 = vadd.f32 0.0, %v392
      %v394 = vpop.f32.mrf.mxu0
      %395 = vdwg.mxu0
      %396 = vmatpush.bf16.msra.mxu0 0
      %397 = vmatpush.bf16.msra.mxu0 0
      %398 = vmatpush.bf16.msra.mxu0 0
      %399 = vmatpush.bf16.msra.mxu0 0
      %400 = vmatpush.bf16.msra.mxu0 0
      %401 = vmatpush.bf16.msra.mxu0 0
      %402 = vmatpush.bf16.msra.mxu0 0
      %403 = vmatpush.bf16.msra.mxu0 %v368
      %404 = vmatmul.bf16.gmra.mxu0 %v358
      %v405 = vpop.f32.mrf.mxu0
      %v406 = vadd.f32 0.0, %v405
      %v407 = vpop.f32.mrf.mxu0
      %408 = vdwg.mxu0
      %409 = vst [vmem:[#allocation1] ss:$4 sm:$0xff] %v335
      %v410 = vld.sshfl [vmem:[#allocation1] sm:$0xff pattern:$0x73625140]
      %v411 = vld.sshfl [vmem:[#allocation1 + $0x8] sm:$0xff pattern:$0x73625140]
      %v412 = vld.sshfl [vmem:[#allocation1 + $0x10] sm:$0xff pattern:$0x73625140]
      %v414 = vsel %vm356, %v336, 0
      %v416 = vsel %vm360, %v410, 0
      %v418 = vsel %vm360, %v411, 0
      %v420 = vsel %vm360, %v412, 0
      %422 = vmatpush.bf16.msra.mxu0 0
      %423 = vmatpush.bf16.msra.mxu0 0
      %424 = vmatpush.bf16.msra.mxu0 0
      %425 = vmatpush.bf16.msra.mxu0 0
      %426 = vmatpush.bf16.msra.mxu0 0
      %427 = vmatpush.bf16.msra.mxu0 0
      %428 = vmatpush.bf16.msra.mxu0 0
      %429 = vmatpush.bf16.msra.mxu0 %v416
      %430 = vmatmul.bf16.gmra.mxu0 %v414
      %v431 = vpop.f32.mrf.mxu0
      %v432 = vadd.f32 %v380, %v431
      %v433 = vpop.f32.mrf.mxu0
      %434 = vdwg.mxu0
      %435 = vmatpush.bf16.msra.mxu0 0
      %436 = vmatpush.bf16.msra.mxu0 0
      %437 = vmatpush.bf16.msra.mxu0 0
      %438 = vmatpush.bf16.msra.mxu0 0
      %439 = vmatpush.bf16.msra.mxu0 0
      %440 = vmatpush.bf16.msra.mxu0 0
      %441 = vmatpush.bf16.msra.mxu0 0
      %442 = vmatpush.bf16.msra.mxu0 %v418
      %443 = vmatmul.bf16.gmra.mxu0 %v414
      %v444 = vpop.f32.mrf.mxu0
      %v445 = vadd.f32 %v393, %v444
      %v446 = vpop.f32.mrf.mxu0
      %447 = vdwg.mxu0
      %448 = vmatpush.bf16.msra.mxu0 0
      %449 = vmatpush.bf16.msra.mxu0 0
      %450 = vmatpush.bf16.msra.mxu0 0
      %451 = vmatpush.bf16.msra.mxu0 0
      %452 = vmatpush.bf16.msra.mxu0 0
      %453 = vmatpush.bf16.msra.mxu0 0
      %454 = vmatpush.bf16.msra.mxu0 0
      %455 = vmatpush.bf16.msra.mxu0 %v420
      %456 = vmatmul.bf16.gmra.mxu0 %v414
      %v457 = vpop.f32.mrf.mxu0
      %v458 = vadd.f32 %v406, %v457
      %v459 = vpop.f32.mrf.mxu0
      %460 = vdwg.mxu0
      %v461 = vld [vmem:[%s310] sm:$0x3f]
      %s462 = scalar_lea.vmem %s1, 8
      %v463 = vld [vmem:[%s462] sm:$0xf]
      %465 = vst [vmem:[#allocation1] ss:$4 sm:$0xff] %v461
      %v466 = vld.sshfl [vmem:[#allocation1] sm:$0xff pattern:$0x73625140]
      %v468 = vld.sshfl [vmem:[#allocation1 + $0x8] sm:$0xff pattern:$0x73625140]
      %v470 = vld.sshfl [vmem:[#allocation1 + $0x10] sm:$0xff pattern:$0x73625140]
      %472 = vrot.lane.b32.xlu0 %v466, 126
      %v473 = vpop.permute.xlu0 %472
      %474 = vrot.lane.b32.xlu0 %v468, 126
      %v475 = vpop.permute.xlu0 %474
      %476 = vrot.lane.b32.xlu0 %v470, 126
      %v477 = vpop.permute.xlu0 %476
      %vm478 = vcmask 1031168
      %v479 = vsel %vm478, %v473, %v475
      %v480 = vsel %vm478, %v475, %v477
      %v482 = vsel %vm356, %v463, 0
      %v485 = vsel %vm360, %v479, 0
      %v488 = vsel %vm360, %v480, 0
      %v491 = vsel %vm360, %v477, 0
      %493 = vmatpush.bf16.msra.mxu0 0
      %494 = vmatpush.bf16.msra.mxu0 0
      %495 = vmatpush.bf16.msra.mxu0 0
      %496 = vmatpush.bf16.msra.mxu0 0
      %497 = vmatpush.bf16.msra.mxu0 0
      %498 = vmatpush.bf16.msra.mxu0 0
      %499 = vmatpush.bf16.msra.mxu0 0
      %500 = vmatpush.bf16.msra.mxu0 %v485
      %501 = vmatmul.bf16.gmra.mxu0 %v482
      %v502 = vpop.f32.mrf.mxu0
      %v503 = vadd.f32 0.0, %v502
      %v504 = vpop.f32.mrf.mxu0
      %505 = vdwg.mxu0
      %506 = vmatpush.bf16.msra.mxu0 0
      %507 = vmatpush.bf16.msra.mxu0 0
      %508 = vmatpush.bf16.msra.mxu0 0
      %509 = vmatpush.bf16.msra.mxu0 0
      %510 = vmatpush.bf16.msra.mxu0 0
      %511 = vmatpush.bf16.msra.mxu0 0
      %512 = vmatpush.bf16.msra.mxu0 0
      %513 = vmatpush.bf16.msra.mxu0 %v488
      %514 = vmatmul.bf16.gmra.mxu0 %v482
      %v515 = vpop.f32.mrf.mxu0
      %v516 = vadd.f32 0.0, %v515
      %v517 = vpop.f32.mrf.mxu0
      %518 = vdwg.mxu0
      %519 = vmatpush.bf16.msra.mxu0 0
      %520 = vmatpush.bf16.msra.mxu0 0
      %521 = vmatpush.bf16.msra.mxu0 0
      %522 = vmatpush.bf16.msra.mxu0 0
      %523 = vmatpush.bf16.msra.mxu0 0
      %524 = vmatpush.bf16.msra.mxu0 0
      %525 = vmatpush.bf16.msra.mxu0 0
      %526 = vmatpush.bf16.msra.mxu0 %v491
      %527 = vmatmul.bf16.gmra.mxu0 %v482
      %v528 = vpop.f32.mrf.mxu0
      %v529 = vadd.f32 0.0, %v528
      %v530 = vpop.f32.mrf.mxu0
      %531 = vdwg.mxu0
      %v532 = vadd.f32 %v432, %v503
      %v533 = vadd.f32 %v445, %v516
      %v534 = vadd.f32 %v458, %v529
      %v535 = vld [vmem:[%s310] sm:$0x3f]
      %s536 = scalar_lea.vmem %s1, 12
      %v537 = vld [vmem:[%s536] sm:$0xf]
      %539 = vst [vmem:[#allocation1] ss:$4 sm:$0xff] %v535
      %v540 = vld.sshfl [vmem:[#allocation1] sm:$0xff pattern:$0x73625140]
      %v542 = vld.sshfl [vmem:[#allocation1 + $0x8] sm:$0xff pattern:$0x73625140]
      %v544 = vld.sshfl [vmem:[#allocation1 + $0x10] sm:$0xff pattern:$0x73625140]
      %546 = vrot.lane.b32.xlu0 %v540, 110
      %v547 = vpop.permute.xlu0 %546
      %548 = vrot.lane.b32.xlu0 %v542, 110
      %v549 = vpop.permute.xlu0 %548
      %550 = vrot.lane.b32.xlu0 %v544, 110
      %v551 = vpop.permute.xlu0 %550
      %vm552 = vcmask 900096
      %v553 = vsel %vm552, %v547, %v549
      %v554 = vsel %vm552, %v549, %v551
      %v556 = vsel %vm356, %v537, 0
      %v559 = vsel %vm360, %v553, 0
      %v562 = vsel %vm360, %v554, 0
      %v565 = vsel %vm360, %v551, 0
      %567 = vmatpush.bf16.msra.mxu0 0
      %568 = vmatpush.bf16.msra.mxu0 0
      %569 = vmatpush.bf16.msra.mxu0 0
      %570 = vmatpush.bf16.msra.mxu0 0
      %571 = vmatpush.bf16.msra.mxu0 0
      %572 = vmatpush.bf16.msra.mxu0 0
      %573 = vmatpush.bf16.msra.mxu0 0
      %574 = vmatpush.bf16.msra.mxu0 %v559
      %575 = vmatmul.bf16.gmra.mxu0 %v556
      %v576 = vpop.f32.mrf.mxu0
      %v577 = vadd.f32 0.0, %v576
      %v578 = vpop.f32.mrf.mxu0
      %579 = vdwg.mxu0
      %580 = vmatpush.bf16.msra.mxu0 0
      %581 = vmatpush.bf16.msra.mxu0 0
      %582 = vmatpush.bf16.msra.mxu0 0
      %583 = vmatpush.bf16.msra.mxu0 0
      %584 = vmatpush.bf16.msra.mxu0 0
      %585 = vmatpush.bf16.msra.mxu0 0
      %586 = vmatpush.bf16.msra.mxu0 0
      %587 = vmatpush.bf16.msra.mxu0 %v562
      %588 = vmatmul.bf16.gmra.mxu0 %v556
      %v589 = vpop.f32.mrf.mxu0
      %v590 = vadd.f32 0.0, %v589
      %v591 = vpop.f32.mrf.mxu0
      %592 = vdwg.mxu0
      %593 = vmatpush.bf16.msra.mxu0 0
      %594 = vmatpush.bf16.msra.mxu0 0
      %595 = vmatpush.bf16.msra.mxu0 0
      %596 = vmatpush.bf16.msra.mxu0 0
      %597 = vmatpush.bf16.msra.mxu0 0
      %598 = vmatpush.bf16.msra.mxu0 0
      %599 = vmatpush.bf16.msra.mxu0 0
      %600 = vmatpush.bf16.msra.mxu0 %v565
      %601 = vmatmul.bf16.gmra.mxu0 %v556
      %v602 = vpop.f32.mrf.mxu0
      %v603 = vadd.f32 0.0, %v602
      %v604 = vpop.f32.mrf.mxu0
      %605 = vdwg.mxu0
      %v606 = vadd.f32 %v532, %v577
      %v607 = vadd.f32 %v533, %v590
      %v608 = vadd.f32 %v534, %v603
      %v609 = vld [vmem:[%s310] sm:$0x3f]
      %s610 = scalar_lea.vmem %s1, 16
      %v611 = vld [vmem:[%s610] sm:$0xf]
      %613 = vst [vmem:[#allocation1] ss:$4 sm:$0xff] %v609
      %v614 = vld.sshfl [vmem:[#allocation1] sm:$0xff pattern:$0x73625140]
      %v616 = vld.sshfl [vmem:[#allocation1 + $0x8] sm:$0xff pattern:$0x73625140]
      %v618 = vld.sshfl [vmem:[#allocation1 + $0x10] sm:$0xff pattern:$0x73625140]
      %620 = vrot.lane.b32.xlu0 %v614, 109
      %v621 = vpop.permute.xlu0 %620
      %622 = vrot.lane.b32.xlu0 %v616, 109
      %v623 = vpop.permute.xlu0 %622
      %624 = vrot.lane.b32.xlu0 %v618, 109
      %v625 = vpop.permute.xlu0 %624
      %vm626 = vcmask 891904
      %v627 = vsel %vm626, %v621, %v623
      %v628 = vsel %vm626, %v623, %v625
      %v630 = vsel %vm356, %v611, 0
      %v633 = vsel %vm360, %v627, 0
      %v636 = vsel %vm360, %v628, 0
      %v639 = vsel %vm360, %v625, 0
      %641 = vmatpush.bf16.msra.mxu0 0
      %642 = vmatpush.bf16.msra.mxu0 0
      %643 = vmatpush.bf16.msra.mxu0 0
      %644 = vmatpush.bf16.msra.mxu0 0
      %645 = vmatpush.bf16.msra.mxu0 0
      %646 = vmatpush.bf16.msra.mxu0 0
      %647 = vmatpush.bf16.msra.mxu0 0
      %648 = vmatpush.bf16.msra.mxu0 %v633
      %649 = vmatmul.bf16.gmra.mxu0 %v630
      %v650 = vpop.f32.mrf.mxu0
      %v651 = vadd.f32 0.0, %v650
      %v652 = vpop.f32.mrf.mxu0
      %653 = vdwg.mxu0
      %654 = vmatpush.bf16.msra.mxu0 0
      %655 = vmatpush.bf16.msra.mxu0 0
      %656 = vmatpush.bf16.msra.mxu0 0
      %657 = vmatpush.bf16.msra.mxu0 0
      %658 = vmatpush.bf16.msra.mxu0 0
      %659 = vmatpush.bf16.msra.mxu0 0
      %660 = vmatpush.bf16.msra.mxu0 0
      %661 = vmatpush.bf16.msra.mxu0 %v636
      %662 = vmatmul.bf16.gmra.mxu0 %v630
      %v663 = vpop.f32.mrf.mxu0
      %v664 = vadd.f32 0.0, %v663
      %v665 = vpop.f32.mrf.mxu0
      %666 = vdwg.mxu0
      %667 = vmatpush.bf16.msra.mxu0 0
      %668 = vmatpush.bf16.msra.mxu0 0
      %669 = vmatpush.bf16.msra.mxu0 0
      %670 = vmatpush.bf16.msra.mxu0 0
      %671 = vmatpush.bf16.msra.mxu0 0
      %672 = vmatpush.bf16.msra.mxu0 0
      %673 = vmatpush.bf16.msra.mxu0 0
      %674 = vmatpush.bf16.msra.mxu0 %v639
      %675 = vmatmul.bf16.gmra.mxu0 %v630
      %v676 = vpop.f32.mrf.mxu0
      %v677 = vadd.f32 0.0, %v676
      %v678 = vpop.f32.mrf.mxu0
      %679 = vdwg.mxu0
      %v680 = vadd.f32 %v606, %v651
      %v681 = vadd.f32 %v607, %v664
      %v682 = vadd.f32 %v608, %v677
      %v683 = vld [vmem:[%s310] sm:$0x3f]
      %s684 = scalar_lea.vmem %s1, 20
      %v685 = vld [vmem:[%s684] sm:$0xf]
      %687 = vst [vmem:[#allocation1] ss:$4 sm:$0xff] %v683
      %v688 = vld.sshfl [vmem:[#allocation1] sm:$0xff pattern:$0x73625140]
      %v690 = vld.sshfl [vmem:[#allocation1 + $0x8] sm:$0xff pattern:$0x73625140]
      %v692 = vld.sshfl [vmem:[#allocation1 + $0x10] sm:$0xff pattern:$0x73625140]
      %694 = vrot.lane.b32.xlu0 %v688, 108
      %v695 = vpop.permute.xlu0 %694
      %696 = vrot.lane.b32.xlu0 %v690, 108
      %v697 = vpop.permute.xlu0 %696
      %698 = vrot.lane.b32.xlu0 %v692, 108
      %v699 = vpop.permute.xlu0 %698
      %vm700 = vcmask 883712
      %v701 = vsel %vm700, %v695, %v697
      %v702 = vsel %vm700, %v697, %v699
      %v704 = vsel %vm356, %v685, 0
      %v707 = vsel %vm360, %v701, 0
      %v710 = vsel %vm360, %v702, 0
      %v713 = vsel %vm360, %v699, 0
      %715 = vmatpush.bf16.msra.mxu0 0
      %716 = vmatpush.bf16.msra.mxu0 0
      %717 = vmatpush.bf16.msra.mxu0 0
      %718 = vmatpush.bf16.msra.mxu0 0
      %719 = vmatpush.bf16.msra.mxu0 0
      %720 = vmatpush.bf16.msra.mxu0 0
      %721 = vmatpush.bf16.msra.mxu0 0
      %722 = vmatpush.bf16.msra.mxu0 %v707
      %723 = vmatmul.bf16.gmra.mxu0 %v704
      %v724 = vpop.f32.mrf.mxu0
      %v725 = vadd.f32 0.0, %v724
      %v726 = vpop.f32.mrf.mxu0
      %727 = vdwg.mxu0
      %728 = vmatpush.bf16.msra.mxu0 0
      %729 = vmatpush.bf16.msra.mxu0 0
      %730 = vmatpush.bf16.msra.mxu0 0
      %731 = vmatpush.bf16.msra.mxu0 0
      %732 = vmatpush.bf16.msra.mxu0 0
      %733 = vmatpush.bf16.msra.mxu0 0
      %734 = vmatpush.bf16.msra.mxu0 0
      %735 = vmatpush.bf16.msra.mxu0 %v710
      %736 = vmatmul.bf16.gmra.mxu0 %v704
      %v737 = vpop.f32.mrf.mxu0
      %v738 = vadd.f32 0.0, %v737
      %v739 = vpop.f32.mrf.mxu0
      %740 = vdwg.mxu0
      %741 = vmatpush.bf16.msra.mxu0 0
      %742 = vmatpush.bf16.msra.mxu0 0
      %743 = vmatpush.bf16.msra.mxu0 0
      %744 = vmatpush.bf16.msra.mxu0 0
      %745 = vmatpush.bf16.msra.mxu0 0
      %746 = vmatpush.bf16.msra.mxu0 0
      %747 = vmatpush.bf16.msra.mxu0 0
      %748 = vmatpush.bf16.msra.mxu0 %v713
      %749 = vmatmul.bf16.gmra.mxu0 %v704
      %v750 = vpop.f32.mrf.mxu0
      %v751 = vadd.f32 0.0, %v750
      %v752 = vpop.f32.mrf.mxu0
      %753 = vdwg.mxu0
      %v754 = vadd.f32 %v680, %v725
      %v755 = vadd.f32 %v681, %v738
      %v756 = vadd.f32 %v682, %v751
      %v757 = vld [vmem:[%s310] sm:$0x3f]
      %s758 = scalar_lea.vmem %s1, 24
      %v759 = vld [vmem:[%s758] sm:$0xf]
      %761 = vst [vmem:[#allocation1] ss:$4 sm:$0xff] %v757
      %v762 = vld.sshfl [vmem:[#allocation1] sm:$0xff pattern:$0x73625140]
      %v764 = vld.sshfl [vmem:[#allocation1 + $0x8] sm:$0xff pattern:$0x73625140]
      %v766 = vld.sshfl [vmem:[#allocation1 + $0x10] sm:$0xff pattern:$0x73625140]
      %768 = vrot.lane.b32.xlu0 %v762, 92
      %v769 = vpop.permute.xlu0 %768
      %770 = vrot.lane.b32.xlu0 %v764, 92
      %v771 = vpop.permute.xlu0 %770
      %772 = vrot.lane.b32.xlu0 %v766, 92
      %v773 = vpop.permute.xlu0 %772
      %vm774 = vcmask 752640
      %v775 = vsel %vm774, %v769, %v771
      %v776 = vsel %vm774, %v771, %v773
      %v778 = vsel %vm356, %v759, 0
      %v781 = vsel %vm360, %v775, 0
      %v784 = vsel %vm360, %v776, 0
      %v787 = vsel %vm360, %v773, 0
      %789 = vmatpush.bf16.msra.mxu0 0
      %790 = vmatpush.bf16.msra.mxu0 0
      %791 = vmatpush.bf16.msra.mxu0 0
      %792 = vmatpush.bf16.msra.mxu0 0
      %793 = vmatpush.bf16.msra.mxu0 0
      %794 = vmatpush.bf16.msra.mxu0 0
      %795 = vmatpush.bf16.msra.mxu0 0
      %796 = vmatpush.bf16.msra.mxu0 %v781
      %797 = vmatmul.bf16.gmra.mxu0 %v778
      %v798 = vpop.f32.mrf.mxu0
      %v799 = vadd.f32 0.0, %v798
      %v800 = vpop.f32.mrf.mxu0
      %801 = vdwg.mxu0
      %802 = vmatpush.bf16.msra.mxu0 0
      %803 = vmatpush.bf16.msra.mxu0 0
      %804 = vmatpush.bf16.msra.mxu0 0
      %805 = vmatpush.bf16.msra.mxu0 0
      %806 = vmatpush.bf16.msra.mxu0 0
      %807 = vmatpush.bf16.msra.mxu0 0
      %808 = vmatpush.bf16.msra.mxu0 0
      %809 = vmatpush.bf16.msra.mxu0 %v784
      %810 = vmatmul.bf16.gmra.mxu0 %v778
      %v811 = vpop.f32.mrf.mxu0
      %v812 = vadd.f32 0.0, %v811
      %v813 = vpop.f32.mrf.mxu0
      %814 = vdwg.mxu0
      %815 = vmatpush.bf16.msra.mxu0 0
      %816 = vmatpush.bf16.msra.mxu0 0
      %817 = vmatpush.bf16.msra.mxu0 0
      %818 = vmatpush.bf16.msra.mxu0 0
      %819 = vmatpush.bf16.msra.mxu0 0
      %820 = vmatpush.bf16.msra.mxu0 0
      %821 = vmatpush.bf16.msra.mxu0 0
      %822 = vmatpush.bf16.msra.mxu0 %v787
      %823 = vmatmul.bf16.gmra.mxu0 %v778
      %v824 = vpop.f32.mrf.mxu0
      %v825 = vadd.f32 0.0, %v824
      %v826 = vpop.f32.mrf.mxu0
      %827 = vdwg.mxu0
      %v828 = vadd.f32 %v754, %v799
      %v829 = vadd.f32 %v755, %v812
      %v830 = vadd.f32 %v756, %v825
      %v831 = vld [vmem:[%s310] sm:$0x3f]
      %s832 = scalar_lea.vmem %s1, 28
      %v833 = vld [vmem:[%s832] sm:$0xf]
      %835 = vst [vmem:[#allocation1] ss:$4 sm:$0xff] %v831
      %v836 = vld.sshfl [vmem:[#allocation1] sm:$0xff pattern:$0x73625140]
      %v838 = vld.sshfl [vmem:[#allocation1 + $0x8] sm:$0xff pattern:$0x73625140]
      %v840 = vld.sshfl [vmem:[#allocation1 + $0x10] sm:$0xff pattern:$0x73625140]
      %842 = vrot.lane.b32.xlu0 %v836, 91
      %v843 = vpop.permute.xlu0 %842
      %844 = vrot.lane.b32.xlu0 %v838, 91
      %v845 = vpop.permute.xlu0 %844
      %846 = vrot.lane.b32.xlu0 %v840, 91
      %v847 = vpop.permute.xlu0 %846
      %vm848 = vcmask 744448
      %v849 = vsel %vm848, %v843, %v845
      %v850 = vsel %vm848, %v845, %v847
      %v852 = vsel %vm356, %v833, 0
      %v855 = vsel %vm360, %v849, 0
      %v858 = vsel %vm360, %v850, 0
      %v861 = vsel %vm360, %v847, 0
      %863 = vmatpush.bf16.msra.mxu0 0
      %864 = vmatpush.bf16.msra.mxu0 0
      %865 = vmatpush.bf16.msra.mxu0 0
      %866 = vmatpush.bf16.msra.mxu0 0
      %867 = vmatpush.bf16.msra.mxu0 0
      %868 = vmatpush.bf16.msra.mxu0 0
      %869 = vmatpush.bf16.msra.mxu0 0
      %870 = vmatpush.bf16.msra.mxu0 %v855
      %871 = vmatmul.bf16.gmra.mxu0 %v852
      %v872 = vpop.f32.mrf.mxu0
      %v873 = vadd.f32 0.0, %v872
      %v874 = vpop.f32.mrf.mxu0
      %875 = vdwg.mxu0
      %876 = vmatpush.bf16.msra.mxu0 0
      %877 = vmatpush.bf16.msra.mxu0 0
      %878 = vmatpush.bf16.msra.mxu0 0
      %879 = vmatpush.bf16.msra.mxu0 0
      %880 = vmatpush.bf16.msra.mxu0 0
      %881 = vmatpush.bf16.msra.mxu0 0
      %882 = vmatpush.bf16.msra.mxu0 0
      %883 = vmatpush.bf16.msra.mxu0 %v858
      %884 = vmatmul.bf16.gmra.mxu0 %v852
      %v885 = vpop.f32.mrf.mxu0
      %v886 = vadd.f32 0.0, %v885
      %v887 = vpop.f32.mrf.mxu0
      %888 = vdwg.mxu0
      %889 = vmatpush.bf16.msra.mxu0 0
      %890 = vmatpush.bf16.msra.mxu0 0
      %891 = vmatpush.bf16.msra.mxu0 0
      %892 = vmatpush.bf16.msra.mxu0 0
      %893 = vmatpush.bf16.msra.mxu0 0
      %894 = vmatpush.bf16.msra.mxu0 0
      %895 = vmatpush.bf16.msra.mxu0 0
      %896 = vmatpush.bf16.msra.mxu0 %v861
      %897 = vmatmul.bf16.gmra.mxu0 %v852
      %v898 = vpop.f32.mrf.mxu0
      %v899 = vadd.f32 0.0, %v898
      %v900 = vpop.f32.mrf.mxu0
      %901 = vdwg.mxu0
      %v902 = vadd.f32 %v828, %v873
      %v903 = vadd.f32 %v829, %v886
      %v904 = vadd.f32 %v830, %v899
      %v905 = vld [vmem:[%s310] sm:$0x3f]
      %s906 = scalar_lea.vmem %s1, 32
      %v907 = vld [vmem:[%s906] sm:$0xf]
      %909 = vst [vmem:[#allocation1] ss:$4 sm:$0xff] %v905
      %v910 = vld.sshfl [vmem:[#allocation1] sm:$0xff pattern:$0x73625140]
      %v912 = vld.sshfl [vmem:[#allocation1 + $0x8] sm:$0xff pattern:$0x73625140]
      %v914 = vld.sshfl [vmem:[#allocation1 + $0x10] sm:$0xff pattern:$0x73625140]
      %916 = vrot.lane.b32.xlu0 %v910, 90
      %v917 = vpop.permute.xlu0 %916
      %918 = vrot.lane.b32.xlu0 %v912, 90
      %v919 = vpop.permute.xlu0 %918
      %920 = vrot.lane.b32.xlu0 %v914, 90
      %v921 = vpop.permute.xlu0 %920
      %vm922 = vcmask 736256
      %v923 = vsel %vm922, %v917, %v919
      %v924 = vsel %vm922, %v919, %v921
      %v926 = vsel %vm356, %v907, 0
      %v929 = vsel %vm360, %v923, 0
      %v932 = vsel %vm360, %v924, 0
      %v935 = vsel %vm360, %v921, 0
      %937 = vmatpush.bf16.msra.mxu0 0
      %938 = vmatpush.bf16.msra.mxu0 0
      %939 = vmatpush.bf16.msra.mxu0 0
      %940 = vmatpush.bf16.msra.mxu0 0
      %941 = vmatpush.bf16.msra.mxu0 0
      %942 = vmatpush.bf16.msra.mxu0 0
      %943 = vmatpush.bf16.msra.mxu0 0
      %944 = vmatpush.bf16.msra.mxu0 %v929
      %945 = vmatmul.bf16.gmra.mxu0 %v926
      %v946 = vpop.f32.mrf.mxu0
      %v947 = vadd.f32 0.0, %v946
      %v948 = vpop.f32.mrf.mxu0
      %949 = vdwg.mxu0
      %950 = vmatpush.bf16.msra.mxu0 0
      %951 = vmatpush.bf16.msra.mxu0 0
      %952 = vmatpush.bf16.msra.mxu0 0
      %953 = vmatpush.bf16.msra.mxu0 0
      %954 = vmatpush.bf16.msra.mxu0 0
      %955 = vmatpush.bf16.msra.mxu0 0
      %956 = vmatpush.bf16.msra.mxu0 0
      %957 = vmatpush.bf16.msra.mxu0 %v932
      %958 = vmatmul.bf16.gmra.mxu0 %v926
      %v959 = vpop.f32.mrf.mxu0
      %v960 = vadd.f32 0.0, %v959
      %v961 = vpop.f32.mrf.mxu0
      %962 = vdwg.mxu0
      %963 = vmatpush.bf16.msra.mxu0 0
      %964 = vmatpush.bf16.msra.mxu0 0
      %965 = vmatpush.bf16.msra.mxu0 0
      %966 = vmatpush.bf16.msra.mxu0 0
      %967 = vmatpush.bf16.msra.mxu0 0
      %968 = vmatpush.bf16.msra.mxu0 0
      %969 = vmatpush.bf16.msra.mxu0 0
      %970 = vmatpush.bf16.msra.mxu0 %v935
      %971 = vmatmul.bf16.gmra.mxu0 %v926
      %v972 = vpop.f32.mrf.mxu0
      %v973 = vadd.f32 0.0, %v972
      %v974 = vpop.f32.mrf.mxu0
      %975 = vdwg.mxu0
      %v976 = vadd.f32 %v902, %v947
      %v977 = vadd.f32 %v903, %v960
      %v978 = vadd.f32 %v904, %v973
      %v979 = vld [vmem:[%s2] sm:$0xff]
      %981 = vset.pattern.permute.xlu0 0
      %982 = vperm.xlu0 %981, %v979
      %v983 = vpop.permute.xlu0 %982
      %v985 = vadd.f32 %v976, %v983
      %v986 = vadd.f32 %v977, %v983
      %v987 = vadd.f32 %v978, %v983
      %v988 = vld [vmem:[%s315] sm:$0x7]
      %vm989 = vcmp.lt.s32.totalorder %v988, 8
      %v990 = vlaneseq
      %v991 = vshrl.u32 %v990, 7
      %v992 = vperm.slane %v988, 0
      %v993 = vperm.slane %v988, 1
      %v994 = vperm.slane %v988, 2
      %vm995 = vcmp.eq.s32.totalorder %v991, %v992
      %vm996 = vcmp.eq.s32.totalorder %v991, %v993
      %vm997 = vcmp.eq.s32.totalorder %v991, %v994
      %v998 = vsel %vm995, 1, 0
      %v999 = vsel %vm996, 1, 0
      %v1000 = vsel %vm997, 1, 0
      %v1001 = vcvt.s32.f32 %v998
      %v1002 = vcvt.s32.f32 %v999
      %v1003 = vcvt.s32.f32 %v1000
      %v1004 = vrot.slane %v985, 4
      %v1005 = vmax.f32 %v985, %v1004
      %v1006 = vrot.slane %v1005, 2
      %v1007 = vmax.f32 %v1005, %v1006
      %v1008 = vrot.slane %v1007, 1
      %v1009 = vmax.f32 %v1007, %v1008
      %v1010 = vrot.slane %v986, 4
      %v1011 = vmax.f32 %v986, %v1010
      %v1012 = vrot.slane %v1011, 2
      %v1013 = vmax.f32 %v1011, %v1012
      %v1014 = vrot.slane %v1013, 1
      %v1015 = vmax.f32 %v1013, %v1014
      %vm1016 = vcmask 261120
      %v1017 = vsel %vm1016, %v987, -inf
      %v1018 = vrot.slane %v1017, 4
      %v1019 = vmax.f32 %v1017, %v1018
      %v1020 = vrot.slane %v1019, 2
      %v1021 = vmax.f32 %v1019, %v1020
      %v1022 = vrot.slane %v1021, 1
      %v1023 = vmax.f32 %v1021, %v1022
      %v1024 = vsub.f32 %v985, %v1009
      %v1025 = vsub.f32 %v986, %v1015
      %v1026 = vsub.f32 %v987, %v1023
      %v1027 = vmul.f32 %v1024, 1.442695
      %v1028 = vpow.pop %v1027
      %v1029 = vmul.f32 %v1025, 1.442695
      %v1030 = vpow.pop %v1029
      %v1031 = vmul.f32 %v1026, 1.442695
      %v1032 = vpow.pop %v1031
      %v1033 = vrot.slane %v1028, 4
      %v1034 = vadd.f32 %v1028, %v1033
      %v1035 = vrot.slane %v1034, 2
      %v1036 = vadd.f32 %v1034, %v1035
      %v1037 = vrot.slane %v1036, 1
      %v1038 = vadd.f32 %v1036, %v1037
      %v1039 = vrot.slane %v1030, 4
      %v1040 = vadd.f32 %v1030, %v1039
      %v1041 = vrot.slane %v1040, 2
      %v1042 = vadd.f32 %v1040, %v1041
      %v1043 = vrot.slane %v1042, 1
      %v1044 = vadd.f32 %v1042, %v1043
      %v1045 = vsel %vm1016, %v1032, 0.0
      %v1046 = vrot.slane %v1045, 4
      %v1047 = vadd.f32 %v1045, %v1046
      %v1048 = vrot.slane %v1047, 2
      %v1049 = vadd.f32 %v1047, %v1048
      %v1050 = vrot.slane %v1049, 1
      %v1051 = vadd.f32 %v1049, %v1050
      %v1052 = vlog2.pop %v1038
      %v1053 = vmul.f32 %v1052, 0.6931472
      %v1054 = vlog2.pop %v1044
      %v1055 = vmul.f32 %v1054, 0.6931472
      %v1056 = vlog2.pop %v1051
      %v1057 = vmul.f32 %v1056, 0.6931472
      %v1058 = vadd.f32 %v1053, %v1009
      %v1059 = vadd.f32 %v1055, %v1015
      %v1060 = vadd.f32 %v1057, %v1023
      %v1061 = vmul.f32 %v985, %v1001
      %v1062 = vmul.f32 %v986, %v1002
      %v1063 = vmul.f32 %v987, %v1003
      %v1064 = vrot.slane %v1061, 4
      %v1065 = vadd.f32 %v1061, %v1064
      %v1066 = vrot.slane %v1065, 2
      %v1067 = vadd.f32 %v1065, %v1066
      %v1068 = vrot.slane %v1067, 1
      %v1069 = vadd.f32 %v1067, %v1068
      %v1070 = vrot.slane %v1062, 4
      %v1071 = vadd.f32 %v1062, %v1070
      %v1072 = vrot.slane %v1071, 2
      %v1073 = vadd.f32 %v1071, %v1072
      %v1074 = vrot.slane %v1073, 1
      %v1075 = vadd.f32 %v1073, %v1074
      %v1076 = vsel %vm1016, %v1063, 0.0
      %v1077 = vrot.slane %v1076, 4
      %v1078 = vadd.f32 %v1076, %v1077
      %v1079 = vrot.slane %v1078, 2
      %v1080 = vadd.f32 %v1078, %v1079
      %v1081 = vrot.slane %v1080, 1
      %v1082 = vadd.f32 %v1080, %v1081
      %v1083 = vsub.f32 %v1058, %v1069
      %v1084 = vsub.f32 %v1059, %v1075
      %v1085 = vsub.f32 %v1060, %v1082
      %v1089 = vrot.slane %v1084, 7
      %v1090 = vrot.slane %v1085, 6
      %vm1091 = vcmask 1040384
      %v1092 = vsel %vm1091, %v1083, %v1089
      %v1093 = vsel %vm360, %v1092, %v1090
      %v1095 = vsel %vm989, %v1093, 0.0
      %v1097 = vperm.slane %v1095, 0
      %v1098 = vperm.slane %v1095, 1
      %v1099 = vperm.slane %v1095, 2
      %v1103 = vsel %vm1091, %v1097, 0.0
      %v1104 = vsel %vm1091, %v1098, 0.0
      %v1105 = vadd.f32 %v1103, %v1104
      %vm1106 = vcmask 253952
      %v1107 = vsel %vm1106, %v1099, 0.0
      %v1108 = vadd.f32 %v1105, %v1107
      %1109 = vadd.xlane.f32.xlu0 %v1108
      %v1110 = vpop.xlane.xlu0 %1109
      %vm1111 = vcmask 0
      %1112 = vst.msk [vmem:[%s320] sm:$0x1] %vm1111, %v1110
      %vm1113 = vcmp.eq.f32.partialorder %v985, %v1009
      %vm1114 = vcmp.eq.f32.partialorder %v986, %v1015
      %vm1115 = vcmp.eq.f32.partialorder %v987, %v1023
      %v1116 = vsel %vm1113, %v991, 8
      %v1117 = vsel %vm1114, %v991, 8
      %v1118 = vsel %vm1115, %v991, 8
      %v1119 = vrot.slane %v1116, 4
      %vm1120 = vcmp.lt.s32.totalorder %v1116, %v1119
      %v1121 = vsel %vm1120, %v1116, %v1119
      %v1122 = vrot.slane %v1121, 2
      %vm1123 = vcmp.lt.s32.totalorder %v1121, %v1122
      %v1124 = vsel %vm1123, %v1121, %v1122
      %v1125 = vrot.slane %v1124, 1
      %vm1126 = vcmp.lt.s32.totalorder %v1124, %v1125
      %v1127 = vsel %vm1126, %v1124, %v1125
      %v1128 = vrot.slane %v1117, 4
      %vm1129 = vcmp.lt.s32.totalorder %v1117, %v1128
      %v1130 = vsel %vm1129, %v1117, %v1128
      %v1131 = vrot.slane %v1130, 2
      %vm1132 = vcmp.lt.s32.totalorder %v1130, %v1131
      %v1133 = vsel %vm1132, %v1130, %v1131
      %v1134 = vrot.slane %v1133, 1
      %vm1135 = vcmp.lt.s32.totalorder %v1133, %v1134
      %v1136 = vsel %vm1135, %v1133, %v1134
      %v1137 = vsel %vm1016, %v1118, 2147483647
      %v1138 = vrot.slane %v1137, 4
      %vm1139 = vcmp.lt.s32.totalorder %v1137, %v1138
      %v1140 = vsel %vm1139, %v1137, %v1138
      %v1141 = vrot.slane %v1140, 2
      %vm1142 = vcmp.lt.s32.totalorder %v1140, %v1141
      %v1143 = vsel %vm1142, %v1140, %v1141
      %v1144 = vrot.slane %v1143, 1
      %vm1145 = vcmp.lt.s32.totalorder %v1143, %v1144
      %v1146 = vsel %vm1145, %v1143, %v1144
      %vm1147 = vcmp.eq.s32.totalorder %v991, %v1127
      %vm1148 = vcmp.eq.s32.totalorder %v991, %v1136
      %vm1149 = vcmp.eq.s32.totalorder %v991, %v1146
      %v1150 = vsel %vm989, 1, 0
      %v1151 = vperm.slane %v1150, 0
      %v1152 = vperm.slane %v1150, 1
      %v1153 = vperm.slane %v1150, 2
      %vm1154 = vcmp.eq.s32.totalorder %v1151, 1
      %vm1155 = vcmp.eq.s32.totalorder %v1152, 1
      %vm1156 = vcmp.eq.s32.totalorder %v1153, 1
      %vm1157 = vmand %vm1147, %vm1154
      %vm1158 = vmand %vm1148, %vm1155
      %vm1159 = vmand %vm1149, %vm1156
      %v1160 = vsel %vm1157, 1, 0
      %v1161 = vsel %vm1158, 1, 0
      %v1162 = vsel %vm1159, 1, 0
      %v1163 = vcvt.s32.f32 %v1160
      %v1164 = vcvt.s32.f32 %v1161
      %v1165 = vcvt.s32.f32 %v1162
      %v1166 = vmul.f32 %v1163, %v1001
      %v1167 = vmul.f32 %v1164, %v1002
      %v1168 = vmul.f32 %v1165, %v1003
      %v1169 = vadd.f32 %v1166, %v1167
      %v1170 = vsel %vm1016, %v1168, 0.0
      %v1171 = vadd.f32 %v1169, %v1170
      %1172 = vadd.xlane.f32.xlu0 %v1171
      %v1173 = vpop.xlane.xlu0 %1172
      %vm1174 = vcmask 7168
      %1175 = vst.msk [vmem:[%s326] sm:$0xff] %vm1174, %v1173
      %v1176 = vmax.f32 %v1163, %v1001
      %v1177 = vmax.f32 %v1164, %v1002
      %v1178 = vmax.f32 %v1165, %v1003
      %v1179 = vadd.f32 %v1176, %v1177
      %v1180 = vsel %vm1016, %v1178, 0.0
      %v1181 = vadd.f32 %v1179, %v1180
      %1182 = vadd.xlane.f32.xlu0 %v1181
      %v1183 = vpop.xlane.xlu0 %1182
      %1184 = vst.msk [vmem:[%s332] sm:$0xff] %vm1174, %v1183
      %s1185 = sadd.s32 %s22, %s23
      %p1186 = scmp.lt.s32.totalorder %s1185, 1
      %s1187 = scalar_select %p1186, %s1185, 1
      %s1188 = scalar_lea.vmem %s4, %s1187
      %s1189 = sadd.s32 %s22, %s23
      %p1190 = scmp.lt.s32.totalorder %s1189, 1
      %s1191 = scalar_select %p1190, %s1189, 1
      %s1192 = smul.addr %s1191, 8
      %s1193 = scalar_lea.vmem %s5, %s1192
      %s1194 = sadd.s32 %s22, %s23
      %p1195 = scmp.lt.s32.totalorder %s1194, 1
      %s1196 = scalar_select %p1195, %s1194, 1
      %s1197 = smul.addr %s1196, 8
      %s1198 = scalar_lea.vmem %s6, %s1197
      // Predicated region
      $region37: #{model_with_loss_forward.1} parent=35 // pred_check
        %p1199 = pneg %p148
      $region38: #{model_with_loss_forward.1} parent=35 // pred_check_branch
        %1201 = sbr.rel (%p1199) target = $region40
      $region39: #{model_with_loss_forward.1} parent=35 // pred_region
        %s1202 = sadd.s32 %s22, %s23
      $region40: #{model_with_loss_forward.1} parent=35 // pred_fallthru
        _
      // Predicated region
      $region41: #{model_with_loss_forward.1} parent=35 // pred_check
        %p1203 = pneg %p176
      $region42: #{model_with_loss_forward.1} parent=35 // pred_check_branch
        %1205 = sbr.rel (%p1203) target = $region44
      $region43: #{model_with_loss_forward.1} parent=35 // pred_region
        %s1206 = sadd.s32 %s22, %s23
      $region44: #{model_with_loss_forward.1} parent=35 // pred_fallthru
        _
      // Predicated region
      $region45: #{model_with_loss_forward.1} parent=35 // pred_check
        %p1207 = pneg %p204
      $region46: #{model_with_loss_forward.1} parent=35 // pred_check_branch
        %1209 = sbr.rel (%p1207) target = $region48
      $region47: #{model_with_loss_forward.1} parent=35 // pred_region
        %s1210 = sadd.s32 %s22, %s23
      $region48: #{model_with_loss_forward.1} parent=35 // pred_fallthru
        _
    $region36: #{model_with_loss_forward.1} parent=5 // pred_fallthru
      _
    %p1211 = scmp.le.s32.totalorder 2, %s13
    // Predicated region
    $region49: #{model_with_loss_forward.1} parent=5 // pred_check
      %p1212 = pneg %p1211
    $region50: #{model_with_loss_forward.1} parent=5 // pred_check_branch
      %1214 = sbr.rel (%p1212) target = $region52
    $region51: #{model_with_loss_forward.1} parent=5 // pred_region
      %s1215 = ssub.s32 %s13, 2
      // Predicated region
      $region53: #{model_with_loss_forward.1} parent=51 // pred_check
        %p1216 = pneg %p154
      $region54: #{model_with_loss_forward.1} parent=51 // pred_check_branch
        %1218 = sbr.rel (%p1216) target = $region56
      $region55: #{model_with_loss_forward.1} parent=51 // pred_region
        %s1219 = sadd.s32 %s24, %s25
        %p1220 = scmp.lt.s32.totalorder %s1219, 1
        %s1221 = scalar_select %p1220, %s1219, 1
        %s1222 = scalar_lea.vmem %s4, %s1221
      $region56: #{model_with_loss_forward.1} parent=51 // pred_fallthru
        _
      // Predicated region
      $region57: #{model_with_loss_forward.1} parent=51 // pred_check
        %p1223 = pneg %p182
      $region58: #{model_with_loss_forward.1} parent=51 // pred_check_branch
        %1225 = sbr.rel (%p1223) target = $region60
      $region59: #{model_with_loss_forward.1} parent=51 // pred_region
        %s1226 = sadd.s32 %s24, %s25
        %p1227 = scmp.lt.s32.totalorder %s1226, 1
        %s1228 = scalar_select %p1227, %s1226, 1
        %s1229 = smul.addr %s1228, 8
        %s1230 = scalar_lea.vmem %s5, %s1229
      $region60: #{model_with_loss_forward.1} parent=51 // pred_fallthru
        _
      // Predicated region
      $region61: #{model_with_loss_forward.1} parent=51 // pred_check
        %p1231 = pneg %p210
      $region62: #{model_with_loss_forward.1} parent=51 // pred_check_branch
        %1233 = sbr.rel (%p1231) target = $region64
      $region63: #{model_with_loss_forward.1} parent=51 // pred_region
        %s1234 = sadd.s32 %s24, %s25
        %p1235 = scmp.lt.s32.totalorder %s1234, 1
        %s1236 = scalar_select %p1235, %s1234, 1
        %s1237 = smul.addr %s1236, 8
        %s1238 = scalar_lea.vmem %s6, %s1237
      $region64: #{model_with_loss_forward.1} parent=51 // pred_fallthru
        _
    $region52: #{model_with_loss_forward.1} parent=5 // pred_fallthru
      _
  $region6: #{model_with_loss_forward.1} parent=0 // loop_footer
    %s17 = sadd.s32 1, %s13
  $region7: #{model_with_loss_forward.1} parent=0 // loop_footer_branch
    %12 = sbr.rel target = $region3
  $region8: #{model_with_loss_forward.1} parent=0 // loop_exit
    _

</llo_original>
